<compile_context>
chip_gen: v7x
topology: tpu7x:2x2x1
jax: 0.10.0
libtpu: 0.0.40
codegen_flags: <defaults>
</compile_context>

<pallas_src>
import functools

import jax
import jax.numpy as jnp
from jax.experimental import pallas as pl
from jax.experimental.pallas import tpu as pltpu


# ----------------------------- model constants ------------------------------
PATCH = 4
IN_CH = 4
PATCH_DIM = IN_CH * PATCH * PATCH      # 64 decoded pixels per patch token
D_MODEL = 32                           # logical transformer width
D_HIDDEN = 64                          # logical MLP hidden width
PAD_D = 128                            # MXU / lane friendly padded widths
PAD_DH = 128
HEAD_PAD = 128                         # padded detection-head channels
N_DET = 7                              # valid detection channels (box/obj/cls)
MATMUL_DTYPE = jnp.bfloat16            # MXU operand dtype (f32 accumulation)


# -----------------------------------------------------------------------------
# TransWeather stage: fused embed -> pre-LN transformer block -> unembed
# -----------------------------------------------------------------------------
def _transweather_kernel(
    tok_ref,
    embed_w_ref, embed_b_ref,
    ln_ref,                       # (4, PAD_D) = [ln1_w; ln1_b; ln2_w; ln2_b]
    wqkv_ref, wo_ref,
    w1_ref, b1_ref, w2_ref, b2_ref,
    uw_ref, ub_ref,
    o_ref,
    *, d_logical,
):
    """One grid step processes NB batch elements (NB*T rows per MXU matmul).

    All model dims are zero-padded to 128; LN stats use the logical width so the
    padded lanes stay exactly zero through every residual."""
    NB, T, pdim = tok_ref.shape
    DP = wo_ref.shape[0]

    tok2 = tok_ref[...].reshape(NB * T, pdim)            # bf16, (NB*T, pd)

    # --- patch embed ---
    x = jnp.dot(tok2, embed_w_ref[...],
                preferred_element_type=jnp.float32) + embed_b_ref[...]

    ln = ln_ref[...]
    inv_d = 1.0 / float(d_logical)

    def layer_norm(z, g, b):
        # single-pass stats (E[x^2] - mu^2): one XLU chain instead of two.
        mu = jnp.sum(z, axis=-1, keepdims=True) * inv_d
        ex2 = jnp.sum(z * z, axis=-1, keepdims=True) * inv_d
        var = ex2 - mu * mu
        return (z - mu) * jax.lax.rsqrt(var + 1e-5) * g + b

    # --- self attention (single head, fused qkv; scale folded into wq) ---
    h = layer_norm(x, ln[0:1, :], ln[1:2, :])
    qkv = jnp.dot(h.astype(MATMUL_DTYPE), wqkv_ref[...],
                  preferred_element_type=jnp.float32)      # (NB*T, 3*DP) f32
    q = qkv[:, :DP].reshape(NB, T, DP).astype(MATMUL_DTYPE)
    k = qkv[:, DP:2 * DP].reshape(NB, T, DP).astype(MATMUL_DTYPE)
    v = qkv[:, 2 * DP:].reshape(NB, T, DP).astype(MATMUL_DTYPE)

    s = jnp.einsum('bqd,bkd->bqk', q, k, preferred_element_type=jnp.float32)
    s = s - jnp.max(s, axis=-1, keepdims=True)
    p = jnp.exp(s)
    # approx reciprocal (EUP slot); small relative error vs an exact softmax.
    p = p * pl.reciprocal(jnp.sum(p, axis=-1, keepdims=True), approx=True)
    attn = jnp.einsum('bqk,bkd->bqd', p.astype(MATMUL_DTYPE), v,
                      preferred_element_type=jnp.float32)
    attn2 = attn.reshape(NB * T, DP).astype(MATMUL_DTYPE)
    x = x + jnp.dot(attn2, wo_ref[...], preferred_element_type=jnp.float32)

    # --- MLP ---
    h2 = layer_norm(x, ln[2:3, :], ln[3:4, :])
    m = jnp.dot(h2.astype(MATMUL_DTYPE), w1_ref[...],
                preferred_element_type=jnp.float32) + b1_ref[...]
    # TODO(synk): PyTorch nn.GELU defaults to exact erf; tanh approx kept here.
    m = jax.nn.gelu(m)
    x = x + jnp.dot(m.astype(MATMUL_DTYPE), w2_ref[...],
                    preferred_element_type=jnp.float32) + b2_ref[...]

    # --- un-embed back to (padded) patch pixels; 128-lane dense store ---
    dec = jnp.dot(x.astype(MATMUL_DTYPE), uw_ref[...],
                  preferred_element_type=jnp.float32) + ub_ref[...]
    o_ref[...] = dec.reshape(NB, T, DP).astype(o_ref.dtype)


def transweather_stage(tok, kp):
    """tok: (N, T, pd) bf16 -> decoded patch pixels (N, T, PAD_D) f32."""
    N, T, pdim = tok.shape
    DP = kp["wo"].shape[0]
    DHP = kp["mlp_w1"].shape[1]

    # Aggregate batch elements per grid step so each matmul sees >=min(256, N*T)
    # rows (review: T=16 rows badly under-fill the MXU).  At production N this
    # also leaves >=2 "parallel" programs for v7x's two TensorCores.
    nb = max(1, min(N, 256 // T))
    while N % nb:        # keep it a divisor; worst case nb=1 (still correct)
        nb -= 1

    const = lambda shape: pl.BlockSpec(shape, lambda b: (0, 0))
    kernel = functools.partial(_transweather_kernel, d_logical=D_MODEL)

    return pl.pallas_call(
        kernel,
        out_shape=jax.ShapeDtypeStruct((N, T, DP), jnp.float32),
        grid=(N // nb,),
        in_specs=[
            pl.BlockSpec((nb, T, pdim), lambda b: (b, 0, 0)),   # tokens
            const((pdim, DP)), const((1, DP)),                  # embed
            const((4, DP)),                                     # packed LN
            const((DP, 3 * DP)), const((DP, DP)),               # wqkv, wo
            const((DP, DHP)), const((1, DHP)),                  # mlp w1/b1
            const((DHP, DP)), const((1, DP)),                   # mlp w2/b2
            const((DP, DP)), const((1, DP)),                    # unembed (padded)
        ],
        out_specs=pl.BlockSpec((nb, T, DP), lambda b: (b, 0, 0)),
        compiler_params=pltpu.CompilerParams(dimension_semantics=("parallel",)),
    )(
        tok,
        kp["embed_w"], kp["embed_b"],
        kp["ln"],
        kp["wqkv"], kp["wo"],
        kp["mlp_w1"], kp["mlp_b1"], kp["mlp_w2"], kp["mlp_b2"],
        kp["unembed_w"], kp["unembed_b"],
    )


# -----------------------------------------------------------------------------
# YOLOv6 stage: fused conv1(3x3,s2) -> SiLU -> conv2(3x3,s2) -> SiLU -> 1x1 head
# -----------------------------------------------------------------------------
def _detector_kernel(sp_ref, w1_ref, b1_ref, w2_ref, b2_ref, wh_ref, bh_ref,
                     o_ref, f1p_ref):
    """One batch element.  sp_ref is the padded, space-to-depth input, so the
    3x3/stride-2 conv1 becomes a 2x2/stride-1 conv: in-kernel im2col with
    contiguous slices only (no HBM cols tensor).  feat1 stays in VMEM."""
    Hs, Ws, Cs = sp_ref.shape
    Ho, Wo = Hs - 1, Ws - 1            # conv1 output spatial (H/2, W/2)
    H2 = Ho // 2                       # conv2 output rows (H/4)
    c1 = w1_ref.shape[1]

    sp = sp_ref[...]                                       # (Hs, Ws, 4C) f32

    # ---- conv1: 2x2 taps over s2d input, one fused matmul ----
    taps1 = [sp[dh:dh + Ho, dw:dw + Wo, :] for dh in range(2) for dw in range(2)]
    cols1 = jnp.concatenate(taps1, axis=-1).reshape(Ho * Wo, 4 * Cs)
    f1 = jnp.dot(cols1.astype(w1_ref.dtype), w1_ref[...],
                 preferred_element_type=jnp.float32) + b1_ref[...]
    f1 = f1 * jax.nn.sigmoid(f1)                           # SiLU (f32, VPU)

    # ---- zero-pad feat1 by 1 in H/W using a VMEM scratch (stays on-chip) ----
    f1p_ref[...] = jnp.zeros_like(f1p_ref)
    f1p_ref[1:Ho + 1, 1:Wo + 1, :] = f1.reshape(Ho, Wo, c1)
    f1p = f1p_ref[...]                                     # (Ho+2, Wo+2, c1)

    # ---- conv2: row stride 2 via major-dim reshape; columns kept at stride 1
    #      (even columns sliced out in the wrapper).
    # TODO(synk): fold the column selection into w2 at prep time to remove the
    #             2x redundant column compute at production sizes.
    taps2 = []
    for kh in range(3):
        rows = f1p[kh:kh + 2 * H2].reshape(H2, 2, Wo + 2, c1)[:, 0]  # (H2,Wo+2,c1)
        for kw in range(3):
            taps2.append(rows[:, kw:kw + Wo, :])                     # (H2,Wo,c1)
    cols2 = jnp.concatenate(taps2, axis=-1).reshape(H2 * Wo, 9 * c1)
    f2 = jnp.dot(cols2.astype(w2_ref.dtype), w2_ref[...],
                 preferred_element_type=jnp.float32) + b2_ref[...]
    f2 = f2 * jax.nn.sigmoid(f2)

    # ---- fused 1x1 detection head, padded to 128 lanes (lane-dense store) ----
    det = jnp.dot(f2.astype(wh_ref.dtype), wh_ref[...],
                  preferred_element_type=jnp.float32) + bh_ref[...]
    o_ref[...] = det.reshape(H2, Wo, -1).astype(o_ref.dtype)


def detector_stage(sp1, kp):
    """sp1: (N, H/2+1, W/2+1, 4C) f32 -> (N, H/4, W/2, HEAD_PAD) f32."""
    N, Hs, Ws, Cs = sp1.shape
    Ho, Wo = Hs - 1, Ws - 1
    H2 = Ho // 2
    c1 = kp["conv1_w"].shape[1]
    c2 = kp["conv2_w"].shape[1]
    K1 = kp["conv1_w"].shape[0]
    K2 = kp["conv2_w"].shape[0]
    NH = kp["head_w"].shape[1]

    const = lambda shape: pl.BlockSpec(shape, lambda b: (0, 0))

    return pl.pallas_call(
        _detector_kernel,
        out_shape=jax.ShapeDtypeStruct((N, H2, Wo, NH), jnp.float32),
        grid=(N,),                                   # >=2 programs for v7x megacore
        in_specs=[
            pl.BlockSpec((None, Hs, Ws, Cs), lambda b: (b, 0, 0, 0)),
            const((K1, c1)), const((1, c1)),
            const((K2, c2)), const((1, c2)),
            const((c2, NH)), const((1, NH)),
        ],
        out_specs=pl.BlockSpec((None, H2, Wo, NH), lambda b: (b, 0, 0, 0)),
        scratch_shapes=[pltpu.VMEM((Ho + 2, Wo + 2, c1), jnp.float32)],
        compiler_params=pltpu.CompilerParams(dimension_semantics=("parallel",)),
    )(sp1, kp["conv1_w"], kp["conv1_b"], kp["conv2_w"], kp["conv2_b"],
      kp["head_w"], kp["head_b"])


# -----------------------------------------------------------------------------
# Glue (pure-JAX layout plumbing, NHWC throughout)
# -----------------------------------------------------------------------------
def patchify_nhwc(x, p):
    N, H, W, C = x.shape
    t = x.reshape(N, H // p, p, W // p, p, C)
    t = t.transpose(0, 1, 3, 2, 4, 5).reshape(N, (H // p) * (W // p), p * p * C)
    return t


def unpatchify_nhwc(tok, N, H, W, C, p):
    t = tok.reshape(N, H // p, W // p, p, p, C)
    return t.transpose(0, 1, 3, 2, 4, 5).reshape(N, H, W, C)


def space_to_depth_padded(x):
    """pad=1 then pack 2x2 spatial blocks into channels: (N,H,W,C)->(N,H/2+1,W/2+1,4C)."""
    N, H, W, C = x.shape
    xp = jnp.pad(x, ((0, 0), (1, 1), (1, 1), (0, 0)))
    Hs, Ws = (H + 2) // 2, (W + 2) // 2
    t = xp.reshape(N, Hs, 2, Ws, 2, C).transpose(0, 1, 3, 2, 4, 5)
    return t.reshape(N, Hs, Ws, 4 * C)


# -----------------------------------------------------------------------------
# Parameters
# -----------------------------------------------------------------------------
def init_params(key):
    D, Dh = D_MODEL, D_HIDDEN
    C, pd = IN_CH, PATCH_DIM
    c1, c2, cdet = 16, 32, N_DET
    ks = jax.random.split(key, 9)

    def w(k, shape):
        return jax.random.normal(k, shape, jnp.float32) / jnp.sqrt(jnp.float32(shape[0]))

    z = lambda n: jnp.zeros((n,), jnp.float32)
    ln = jnp.stack([jnp.ones((D,)), jnp.zeros((D,)),
                    jnp.ones((D,)), jnp.zeros((D,))]).astype(jnp.float32)
    return {
        "embed_w": w(ks[0], (pd, D)), "embed_b": z(D),
        "ln": ln,
        "wqkv": w(ks[1], (D, 3 * D)),
        "wo": w(ks[2], (D, D)),
        "mlp_w1": w(ks[3], (D, Dh)), "mlp_b1": z(Dh),
        "mlp_w2": w(ks[4], (Dh, D)), "mlp_b2": z(D),
        "unembed_w": w(ks[5], (D, pd)), "unembed_b": z(pd),
        "conv1_w": w(ks[6], (9 * C, c1)), "conv1_b": z(c1),
        "conv2_w": w(ks[7], (9 * c1, c2)), "conv2_b": z(c2),
        "head_w": w(ks[8], (c2, cdet)), "head_b": z(cdet),
    }


def prepare_params(p):
    """One-time weight prep: pad to 128-lane widths, fold attention scale into
    wq, fold conv1 into its 2x2-tap space-to-depth form, cast MXU operands to
    bf16 (biases / LN params stay f32)."""
    D, DP, DHP, PD = D_MODEL, PAD_D, PAD_DH, PATCH_DIM
    C = IN_CH
    c1 = p["conv1_w"].shape[1]
    c2 = p["conv2_w"].shape[1]

    def pad2(w, rows, cols):
        return jnp.zeros((rows, cols), jnp.float32).at[:w.shape[0], :w.shape[1]].set(w)

    def padb(b, n):
        return jnp.zeros((1, n), jnp.float32).at[0, :b.shape[0]].set(b)

    mm = lambda w: w.astype(MATMUL_DTYPE)

    # --- TransWeather: zero-pad D/Dh to 128 (padded lanes stay 0 end-to-end) ---
    scale = 1.0 / jnp.sqrt(jnp.float32(D))
    wq = p["wqkv"][:, :D] * scale            # fold attention scale into wq
    wk = p["wqkv"][:, D:2 * D]
    wv = p["wqkv"][:, 2 * D:]
    wqkv = jnp.zeros((DP, 3 * DP), jnp.float32)
    wqkv = (wqkv.at[:D, :D].set(wq)
                 .at[:D, DP:DP + D].set(wk)
                 .at[:D, 2 * DP:2 * DP + D].set(wv))

    kp = {
        "embed_w": mm(pad2(p["embed_w"], PD, DP)),
        "embed_b": padb(p["embed_b"], DP),
        "ln": pad2(p["ln"], 4, DP),
        "wqkv": mm(wqkv),
        "wo": mm(pad2(p["wo"], DP, DP)),
        "mlp_w1": mm(pad2(p["mlp_w1"], DP, DHP)),
        "mlp_b1": padb(p["mlp_b1"], DHP),
        "mlp_w2": mm(pad2(p["mlp_w2"], DHP, DP)),
        "mlp_b2": padb(p["mlp_b2"], DP),
        "unembed_w": mm(pad2(p["unembed_w"], DP, DP)),
        "unembed_b": padb(p["unembed_b"], DP),
    }

    # --- conv1 (3x3,s2,p1) rewritten as a 2x2 conv over the s2d input ---
    w1 = p["conv1_w"].reshape(3, 3, C, c1)
    w1cat = jnp.zeros((2, 2, 2, 2, C, c1), jnp.float32)
    for dh in range(2):
        for dw in range(2):
            for r in range(2):
                for s in range(2):
                    kh, kw = 2 * dh + r, 2 * dw + s
                    if kh < 3 and kw < 3:
                        w1cat = w1cat.at[dh, dw, r, s].set(w1[kh, kw])
    kp["conv1_w"] = mm(w1cat.reshape(16 * C, c1))
    kp["conv1_b"] = padb(p["conv1_b"], c1)
    kp["conv2_w"] = mm(p["conv2_w"])                       # (9*c1, c2), (kh,kw,ci) order
    kp["conv2_b"] = padb(p["conv2_b"], c2)
    kp["head_w"] = mm(pad2(p["head_w"], c2, HEAD_PAD))     # pad head to 128 lanes
    kp["head_b"] = padb(p["head_b"], HEAD_PAD)
    return kp


# -----------------------------------------------------------------------------
# Model forward
# -----------------------------------------------------------------------------
def trans_weather_yolov6(kp, x):
    """x: (N, C, H, W) float32 -> detector map (N, 7, H/4, W/4)."""
    N, C, H, W = x.shape
    pdim = C * PATCH * PATCH

    x_nhwc = x.transpose(0, 2, 3, 1)                       # single NCHW -> NHWC

    # ------------- TransWeather stage (restoration), one fused kernel --------
    tok = patchify_nhwc(x_nhwc, PATCH).astype(MATMUL_DTYPE)   # (N, T, pd) bf16
    dec = transweather_stage(tok, kp)[:, :, :pdim]             # drop padded lanes
    restored = x_nhwc + unpatchify_nhwc(dec, N, H, W, C, PATCH)

    # ------------- YOLOv6 stage: fully fused conv1 -> conv2 -> head ----------
    sp1 = space_to_depth_padded(restored)                  # (N, H/2+1, W/2+1, 4C)
    det = detector_stage(sp1, kp)                          # (N, H/4, W/2, 128)
    out = det[:, :, 0::2, :N_DET]                          # stride-2 cols + valid ch
    return out.transpose(0, 3, 1, 2)                       # NCHW (N, 7, H/4, W/4)


if __name__ == "__main__":
    x = jax.random.normal(jax.random.PRNGKey(0), (2, 4, 16, 16), dtype=jnp.float32)
    params = init_params(jax.random.PRNGKey(1))
    kernel_params = prepare_params(params)                 # one-time weight prep
    fwd = jax.jit(trans_weather_yolov6)
    out = jax.block_until_ready(fwd(kernel_params, x))
    assert out.shape == (2, 7, 4, 4), out.shape
    assert jnp.isfinite(out).all()
    print("KERNEL_OK")
</pallas_src>

<mosaic_0001>
module attributes {stable_mosaic.version = 11 : i64} {
  func.func @_transweather_kernel(%arg0: i32, %arg1: memref<2x16x64xbf16, #tpu.memory_space<vmem>>, %arg2: memref<64x128xbf16, #tpu.memory_space<vmem>>, %arg3: memref<1x128xf32, #tpu.memory_space<vmem>>, %arg4: memref<4x128xf32, #tpu.memory_space<vmem>>, %arg5: memref<128x384xbf16, #tpu.memory_space<vmem>>, %arg6: memref<128x128xbf16, #tpu.memory_space<vmem>>, %arg7: memref<128x128xbf16, #tpu.memory_space<vmem>>, %arg8: memref<1x128xf32, #tpu.memory_space<vmem>>, %arg9: memref<128x128xbf16, #tpu.memory_space<vmem>>, %arg10: memref<1x128xf32, #tpu.memory_space<vmem>>, %arg11: memref<128x128xbf16, #tpu.memory_space<vmem>>, %arg12: memref<1x128xf32, #tpu.memory_space<vmem>>, %arg13: memref<2x16x128xf32, #tpu.memory_space<vmem>>) attributes {dimension_semantics = [#tpu.dimension_semantics<parallel>], iteration_bounds = array<i64: 1>, scalar_prefetch = 0 : i64, scratch_operands = 0 : i64, tpu.core_type = #tpu.core_type<tc>, window_params = [{transform_indices = @transform_0, window_bounds = array<i64: 2, 16, 64>}, {pipeline_mode = #tpu.pipeline_mode<synchronous>, transform_indices = @transform_1, window_bounds = array<i64: 64, 128>}, {pipeline_mode = #tpu.pipeline_mode<synchronous>, transform_indices = @transform_2, window_bounds = array<i64: 1, 128>}, {pipeline_mode = #tpu.pipeline_mode<synchronous>, transform_indices = @transform_3, window_bounds = array<i64: 4, 128>}, {pipeline_mode = #tpu.pipeline_mode<synchronous>, transform_indices = @transform_4, window_bounds = array<i64: 128, 384>}, {pipeline_mode = #tpu.pipeline_mode<synchronous>, transform_indices = @transform_5, window_bounds = array<i64: 128, 128>}, {pipeline_mode = #tpu.pipeline_mode<synchronous>, transform_indices = @transform_6, window_bounds = array<i64: 128, 128>}, {pipeline_mode = #tpu.pipeline_mode<synchronous>, transform_indices = @transform_7, window_bounds = array<i64: 1, 128>}, {pipeline_mode = #tpu.pipeline_mode<synchronous>, transform_indices = @transform_8, window_bounds = array<i64: 128, 128>}, {pipeline_mode = #tpu.pipeline_mode<synchronous>, transform_indices = @transform_9, window_bounds = array<i64: 1, 128>}, {pipeline_mode = #tpu.pipeline_mode<synchronous>, transform_indices = @transform_10, window_bounds = array<i64: 128, 128>}, {pipeline_mode = #tpu.pipeline_mode<synchronous>, transform_indices = @transform_11, window_bounds = array<i64: 1, 128>}, {transform_indices = @transform_12, window_bounds = array<i64: 2, 16, 128>}]} {
    %c0 = arith.constant 0 : index
    %c0_0 = arith.constant 0 : index
    %c0_1 = arith.constant 0 : index
    %0 = vector.load %arg1[%c0, %c0_0, %c0_1] : memref<2x16x64xbf16, #tpu.memory_space<vmem>>, vector<2x16x64xbf16>
    %1 = vector.shape_cast %0 : vector<2x16x64xbf16> to vector<32x64xbf16>
    %c0_2 = arith.constant 0 : index
    %c0_3 = arith.constant 0 : index
    %2 = vector.load %arg2[%c0_2, %c0_3] : memref<64x128xbf16, #tpu.memory_space<vmem>>, vector<64x128xbf16>
    %cst = arith.constant dense<0.000000e+00> : vector<32x128xf32>
    %3 = tpu.matmul %1, %2, %cst {dimension_numbers = #tpu.dot_dimension_numbers<[1], [0], [0], [1], [0, 0, 1, 1], [], []>} : vector<32x64xbf16>, vector<64x128xbf16>, vector<32x128xf32> -> vector<32x128xf32>
    %c0_4 = arith.constant 0 : index
    %c0_5 = arith.constant 0 : index
    %4 = vector.load %arg3[%c0_4, %c0_5] : memref<1x128xf32, #tpu.memory_space<vmem>>, vector<1x128xf32>
    %5 = vector.broadcast %4 : vector<1x128xf32> to vector<32x128xf32>
    %6 = arith.addf %3, %5 : vector<32x128xf32>
    %c0_6 = arith.constant 0 : index
    %c0_7 = arith.constant 0 : index
    %7 = vector.load %arg4[%c0_6, %c0_7] : memref<4x128xf32, #tpu.memory_space<vmem>>, vector<4x128xf32>
    %8 = vector.extract_strided_slice %7 {offsets = [0, 0], sizes = [1, 128], strides = [1, 1]} : vector<4x128xf32> to vector<1x128xf32>
    %9 = vector.extract_strided_slice %7 {offsets = [1, 0], sizes = [1, 128], strides = [1, 1]} : vector<4x128xf32> to vector<1x128xf32>
    %cst_8 = arith.constant dense<0.000000e+00> : vector<32xf32>
    %10 = vector.multi_reduction <add>, %6, %cst_8 [1] : vector<32x128xf32> to vector<32xf32>
    %11 = vector.shape_cast %10 : vector<32xf32> to vector<32x1xf32>
    %cst_9 = arith.constant 3.125000e-02 : f32
    %12 = vector.broadcast %cst_9 : f32 to vector<32x1xf32>
    %13 = arith.mulf %11, %12 : vector<32x1xf32>
    %14 = arith.mulf %6, %6 : vector<32x128xf32>
    %cst_10 = arith.constant dense<0.000000e+00> : vector<32xf32>
    %15 = vector.multi_reduction <add>, %14, %cst_10 [1] : vector<32x128xf32> to vector<32xf32>
    %16 = vector.shape_cast %15 : vector<32xf32> to vector<32x1xf32>
    %cst_11 = arith.constant 3.125000e-02 : f32
    %17 = vector.broadcast %cst_11 : f32 to vector<32x1xf32>
    %18 = arith.mulf %16, %17 : vector<32x1xf32>
    %19 = arith.mulf %13, %13 : vector<32x1xf32>
    %20 = arith.subf %18, %19 : vector<32x1xf32>
    %21 = vector.broadcast %13 : vector<32x1xf32> to vector<32x128xf32>
    %22 = arith.subf %6, %21 : vector<32x128xf32>
    %cst_12 = arith.constant 9.99999974E-6 : f32
    %23 = vector.broadcast %cst_12 : f32 to vector<32x1xf32>
    %24 = arith.addf %20, %23 : vector<32x1xf32>
    %25 = math.rsqrt %24 : vector<32x1xf32>
    %26 = vector.broadcast %25 : vector<32x1xf32> to vector<32x128xf32>
    %27 = arith.mulf %22, %26 : vector<32x128xf32>
    %28 = vector.broadcast %8 : vector<1x128xf32> to vector<32x128xf32>
    %29 = arith.mulf %27, %28 : vector<32x128xf32>
    %30 = vector.broadcast %9 : vector<1x128xf32> to vector<32x128xf32>
    %31 = arith.addf %29, %30 : vector<32x128xf32>
    %32 = arith.truncf %31 : vector<32x128xf32> to vector<32x128xbf16>
    %c0_13 = arith.constant 0 : index
    %c0_14 = arith.constant 0 : index
    %33 = vector.load %arg5[%c0_13, %c0_14] : memref<128x384xbf16, #tpu.memory_space<vmem>>, vector<128x384xbf16>
    %cst_15 = arith.constant dense<0.000000e+00> : vector<32x384xf32>
    %34 = tpu.matmul %32, %33, %cst_15 {dimension_numbers = #tpu.dot_dimension_numbers<[1], [0], [0], [1], [0, 0, 1, 1], [], []>} : vector<32x128xbf16>, vector<128x384xbf16>, vector<32x384xf32> -> vector<32x384xf32>
    %35 = vector.extract_strided_slice %34 {offsets = [0, 0], sizes = [32, 128], strides = [1, 1]} : vector<32x384xf32> to vector<32x128xf32>
    %36 = vector.shape_cast %35 : vector<32x128xf32> to vector<2x16x128xf32>
    %37 = arith.truncf %36 : vector<2x16x128xf32> to vector<2x16x128xbf16>
    %38 = vector.extract_strided_slice %34 {offsets = [0, 128], sizes = [32, 128], strides = [1, 1]} : vector<32x384xf32> to vector<32x128xf32>
    %39 = vector.shape_cast %38 : vector<32x128xf32> to vector<2x16x128xf32>
    %40 = arith.truncf %39 : vector<2x16x128xf32> to vector<2x16x128xbf16>
    %41 = vector.extract_strided_slice %34 {offsets = [0, 256], sizes = [32, 128], strides = [1, 1]} : vector<32x384xf32> to vector<32x128xf32>
    %42 = vector.shape_cast %41 : vector<32x128xf32> to vector<2x16x128xf32>
    %43 = arith.truncf %42 : vector<2x16x128xf32> to vector<2x16x128xbf16>
    "tpu.trace_start"() <{level = 10 : i32, message = "bqd,bkd->bqk"}> : () -> ()
    %cst_16 = arith.constant dense<0.000000e+00> : vector<2x16x16xf32>
    %44 = tpu.matmul %37, %40, %cst_16 {dimension_numbers = #tpu.dot_dimension_numbers<[2], [2], [1], [1], [0, 0, 0, 1, 1, 1], [0], [0]>} : vector<2x16x128xbf16>, vector<2x16x128xbf16>, vector<2x16x16xf32> -> vector<2x16x16xf32>
    "tpu.trace_stop"() : () -> ()
    %cst_17 = arith.constant dense<0xFF800000> : vector<2x16xf32>
    %45 = vector.multi_reduction <maximumf>, %44, %cst_17 [2] : vector<2x16x16xf32> to vector<2x16xf32>
    %46 = vector.shape_cast %45 : vector<2x16xf32> to vector<2x16x1xf32>
    %47 = vector.broadcast %46 : vector<2x16x1xf32> to vector<2x16x16xf32>
    %48 = arith.subf %44, %47 : vector<2x16x16xf32>
    %49 = math.exp %48 : vector<2x16x16xf32>
    %cst_18 = arith.constant dense<0.000000e+00> : vector<2x16xf32>
    %50 = vector.multi_reduction <add>, %49, %cst_18 [2] : vector<2x16x16xf32> to vector<2x16xf32>
    %51 = vector.shape_cast %50 : vector<2x16xf32> to vector<2x16x1xf32>
    %52 = tpu.reciprocal %51 {approx = true} : vector<2x16x1xf32> -> vector<2x16x1xf32>
    %53 = vector.broadcast %52 : vector<2x16x1xf32> to vector<2x16x16xf32>
    %54 = arith.mulf %49, %53 : vector<2x16x16xf32>
    %55 = arith.truncf %54 : vector<2x16x16xf32> to vector<2x16x16xbf16>
    "tpu.trace_start"() <{level = 10 : i32, message = "bqk,bkd->bqd"}> : () -> ()
    %cst_19 = arith.constant dense<0.000000e+00> : vector<2x16x128xf32>
    %56 = tpu.matmul %55, %43, %cst_19 {dimension_numbers = #tpu.dot_dimension_numbers<[2], [1], [1], [2], [0, 0, 0, 1, 1, 2], [0], [0]>} : vector<2x16x16xbf16>, vector<2x16x128xbf16>, vector<2x16x128xf32> -> vector<2x16x128xf32>
    "tpu.trace_stop"() : () -> ()
    %57 = vector.shape_cast %56 : vector<2x16x128xf32> to vector<32x128xf32>
    %58 = arith.truncf %57 : vector<32x128xf32> to vector<32x128xbf16>
    %c0_20 = arith.constant 0 : index
    %c0_21 = arith.constant 0 : index
    %59 = vector.load %arg6[%c0_20, %c0_21] : memref<128x128xbf16, #tpu.memory_space<vmem>>, vector<128x128xbf16>
    %cst_22 = arith.constant dense<0.000000e+00> : vector<32x128xf32>
    %60 = tpu.matmul %58, %59, %cst_22 {dimension_numbers = #tpu.dot_dimension_numbers<[1], [0], [0], [1], [0, 0, 1, 1], [], []>} : vector<32x128xbf16>, vector<128x128xbf16>, vector<32x128xf32> -> vector<32x128xf32>
    %61 = arith.addf %6, %60 : vector<32x128xf32>
    %62 = vector.extract_strided_slice %7 {offsets = [2, 0], sizes = [1, 128], strides = [1, 1]} : vector<4x128xf32> to vector<1x128xf32>
    %63 = vector.extract_strided_slice %7 {offsets = [3, 0], sizes = [1, 128], strides = [1, 1]} : vector<4x128xf32> to vector<1x128xf32>
    %cst_23 = arith.constant dense<0.000000e+00> : vector<32xf32>
    %64 = vector.multi_reduction <add>, %61, %cst_23 [1] : vector<32x128xf32> to vector<32xf32>
    %65 = vector.shape_cast %64 : vector<32xf32> to vector<32x1xf32>
    %cst_24 = arith.constant 3.125000e-02 : f32
    %66 = vector.broadcast %cst_24 : f32 to vector<32x1xf32>
    %67 = arith.mulf %65, %66 : vector<32x1xf32>
    %68 = arith.mulf %61, %61 : vector<32x128xf32>
    %cst_25 = arith.constant dense<0.000000e+00> : vector<32xf32>
    %69 = vector.multi_reduction <add>, %68, %cst_25 [1] : vector<32x128xf32> to vector<32xf32>
    %70 = vector.shape_cast %69 : vector<32xf32> to vector<32x1xf32>
    %cst_26 = arith.constant 3.125000e-02 : f32
    %71 = vector.broadcast %cst_26 : f32 to vector<32x1xf32>
    %72 = arith.mulf %70, %71 : vector<32x1xf32>
    %73 = arith.mulf %67, %67 : vector<32x1xf32>
    %74 = arith.subf %72, %73 : vector<32x1xf32>
    %75 = vector.broadcast %67 : vector<32x1xf32> to vector<32x128xf32>
    %76 = arith.subf %61, %75 : vector<32x128xf32>
    %cst_27 = arith.constant 9.99999974E-6 : f32
    %77 = vector.broadcast %cst_27 : f32 to vector<32x1xf32>
    %78 = arith.addf %74, %77 : vector<32x1xf32>
    %79 = math.rsqrt %78 : vector<32x1xf32>
    %80 = vector.broadcast %79 : vector<32x1xf32> to vector<32x128xf32>
    %81 = arith.mulf %76, %80 : vector<32x128xf32>
    %82 = vector.broadcast %62 : vector<1x128xf32> to vector<32x128xf32>
    %83 = arith.mulf %81, %82 : vector<32x128xf32>
    %84 = vector.broadcast %63 : vector<1x128xf32> to vector<32x128xf32>
    %85 = arith.addf %83, %84 : vector<32x128xf32>
    %86 = arith.truncf %85 : vector<32x128xf32> to vector<32x128xbf16>
    %c0_28 = arith.constant 0 : index
    %c0_29 = arith.constant 0 : index
    %87 = vector.load %arg7[%c0_28, %c0_29] : memref<128x128xbf16, #tpu.memory_space<vmem>>, vector<128x128xbf16>
    %cst_30 = arith.constant dense<0.000000e+00> : vector<32x128xf32>
    %88 = tpu.matmul %86, %87, %cst_30 {dimension_numbers = #tpu.dot_dimension_numbers<[1], [0], [0], [1], [0, 0, 1, 1], [], []>} : vector<32x128xbf16>, vector<128x128xbf16>, vector<32x128xf32> -> vector<32x128xf32>
    %c0_31 = arith.constant 0 : index
    %c0_32 = arith.constant 0 : index
    %89 = vector.load %arg8[%c0_31, %c0_32] : memref<1x128xf32, #tpu.memory_space<vmem>>, vector<1x128xf32>
    %90 = vector.broadcast %89 : vector<1x128xf32> to vector<32x128xf32>
    %91 = arith.addf %88, %90 : vector<32x128xf32>
    %92 = arith.mulf %91, %91 : vector<32x128xf32>
    %93 = arith.mulf %91, %92 : vector<32x128xf32>
    %cst_33 = arith.constant 4.471500e-02 : f32
    %94 = vector.broadcast %cst_33 : f32 to vector<32x128xf32>
    %95 = arith.mulf %94, %93 : vector<32x128xf32>
    %96 = arith.addf %91, %95 : vector<32x128xf32>
    %cst_34 = arith.constant 0.797884583 : f32
    %97 = vector.broadcast %cst_34 : f32 to vector<32x128xf32>
    %98 = arith.mulf %97, %96 : vector<32x128xf32>
    %99 = math.tanh %98 : vector<32x128xf32>
    %cst_35 = arith.constant 1.000000e+00 : f32
    %100 = vector.broadcast %cst_35 : f32 to vector<32x128xf32>
    %101 = arith.addf %100, %99 : vector<32x128xf32>
    %cst_36 = arith.constant 5.000000e-01 : f32
    %102 = vector.broadcast %cst_36 : f32 to vector<32x128xf32>
    %103 = arith.mulf %102, %101 : vector<32x128xf32>
    %104 = arith.mulf %91, %103 : vector<32x128xf32>
    %105 = arith.truncf %104 : vector<32x128xf32> to vector<32x128xbf16>
    %c0_37 = arith.constant 0 : index
    %c0_38 = arith.constant 0 : index
    %106 = vector.load %arg9[%c0_37, %c0_38] : memref<128x128xbf16, #tpu.memory_space<vmem>>, vector<128x128xbf16>
    %cst_39 = arith.constant dense<0.000000e+00> : vector<32x128xf32>
    %107 = tpu.matmul %105, %106, %cst_39 {dimension_numbers = #tpu.dot_dimension_numbers<[1], [0], [0], [1], [0, 0, 1, 1], [], []>} : vector<32x128xbf16>, vector<128x128xbf16>, vector<32x128xf32> -> vector<32x128xf32>
    %108 = arith.addf %61, %107 : vector<32x128xf32>
    %c0_40 = arith.constant 0 : index
    %c0_41 = arith.constant 0 : index
    %109 = vector.load %arg10[%c0_40, %c0_41] : memref<1x128xf32, #tpu.memory_space<vmem>>, vector<1x128xf32>
    %110 = vector.broadcast %109 : vector<1x128xf32> to vector<32x128xf32>
    %111 = arith.addf %108, %110 : vector<32x128xf32>
    %112 = arith.truncf %111 : vector<32x128xf32> to vector<32x128xbf16>
    %c0_42 = arith.constant 0 : index
    %c0_43 = arith.constant 0 : index
    %113 = vector.load %arg11[%c0_42, %c0_43] : memref<128x128xbf16, #tpu.memory_space<vmem>>, vector<128x128xbf16>
    %cst_44 = arith.constant dense<0.000000e+00> : vector<32x128xf32>
    %114 = tpu.matmul %112, %113, %cst_44 {dimension_numbers = #tpu.dot_dimension_numbers<[1], [0], [0], [1], [0, 0, 1, 1], [], []>} : vector<32x128xbf16>, vector<128x128xbf16>, vector<32x128xf32> -> vector<32x128xf32>
    %c0_45 = arith.constant 0 : index
    %c0_46 = arith.constant 0 : index
    %115 = vector.load %arg12[%c0_45, %c0_46] : memref<1x128xf32, #tpu.memory_space<vmem>>, vector<1x128xf32>
    %116 = vector.broadcast %115 : vector<1x128xf32> to vector<32x128xf32>
    %117 = arith.addf %114, %116 : vector<32x128xf32>
    %118 = vector.shape_cast %117 : vector<32x128xf32> to vector<2x16x128xf32>
    %c0_47 = arith.constant 0 : index
    %c0_48 = arith.constant 0 : index
    %c0_49 = arith.constant 0 : index
    %119 = vector.load %arg13[%c0_47, %c0_48, %c0_49] : memref<2x16x128xf32, #tpu.memory_space<vmem>>, vector<2x16x128xf32>
    tpu.vector_store %arg13[%c0_47, %c0_48, %c0_49], %118 {strides = array<i32>} : memref<2x16x128xf32, #tpu.memory_space<vmem>>, vector<2x16x128xf32>,
    return
  }
  func.func @transform_0(%arg0: i32) -> (i32, i32, i32) {
    %c0_i32 = arith.constant 0 : i32
    %c0_i32_0 = arith.constant 0 : i32
    %c0_i32_1 = arith.constant 0 : i32
    return %arg0, %c0_i32, %c0_i32_0 : i32, i32, i32
  }
  func.func @transform_1(%arg0: i32) -> (i32, i32) {
    %c0_i32 = arith.constant 0 : i32
    %c0_i32_0 = arith.constant 0 : i32
    %c0_i32_1 = arith.constant 0 : i32
    return %c0_i32, %c0_i32_0 : i32, i32
  }
  func.func @transform_2(%arg0: i32) -> (i32, i32) {
    %c0_i32 = arith.constant 0 : i32
    %c0_i32_0 = arith.constant 0 : i32
    %c0_i32_1 = arith.constant 0 : i32
    return %c0_i32, %c0_i32_0 : i32, i32
  }
  func.func @transform_3(%arg0: i32) -> (i32, i32) {
    %c0_i32 = arith.constant 0 : i32
    %c0_i32_0 = arith.constant 0 : i32
    %c0_i32_1 = arith.constant 0 : i32
    return %c0_i32, %c0_i32_0 : i32, i32
  }
  func.func @transform_4(%arg0: i32) -> (i32, i32) {
    %c0_i32 = arith.constant 0 : i32
    %c0_i32_0 = arith.constant 0 : i32
    %c0_i32_1 = arith.constant 0 : i32
    return %c0_i32, %c0_i32_0 : i32, i32
  }
  func.func @transform_5(%arg0: i32) -> (i32, i32) {
    %c0_i32 = arith.constant 0 : i32
    %c0_i32_0 = arith.constant 0 : i32
    %c0_i32_1 = arith.constant 0 : i32
    return %c0_i32, %c0_i32_0 : i32, i32
  }
  func.func @transform_6(%arg0: i32) -> (i32, i32) {
    %c0_i32 = arith.constant 0 : i32
    %c0_i32_0 = arith.constant 0 : i32
    %c0_i32_1 = arith.constant 0 : i32
    return %c0_i32, %c0_i32_0 : i32, i32
  }
  func.func @transform_7(%arg0: i32) -> (i32, i32) {
    %c0_i32 = arith.constant 0 : i32
    %c0_i32_0 = arith.constant 0 : i32
    %c0_i32_1 = arith.constant 0 : i32
    return %c0_i32, %c0_i32_0 : i32, i32
  }
  func.func @transform_8(%arg0: i32) -> (i32, i32) {
    %c0_i32 = arith.constant 0 : i32
    %c0_i32_0 = arith.constant 0 : i32
    %c0_i32_1 = arith.constant 0 : i32
    return %c0_i32, %c0_i32_0 : i32, i32
  }
  func.func @transform_9(%arg0: i32) -> (i32, i32) {
    %c0_i32 = arith.constant 0 : i32
    %c0_i32_0 = arith.constant 0 : i32
    %c0_i32_1 = arith.constant 0 : i32
    return %c0_i32, %c0_i32_0 : i32, i32
  }
  func.func @transform_10(%arg0: i32) -> (i32, i32) {
    %c0_i32 = arith.constant 0 : i32
    %c0_i32_0 = arith.constant 0 : i32
    %c0_i32_1 = arith.constant 0 : i32
    return %c0_i32, %c0_i32_0 : i32, i32
  }
  func.func @transform_11(%arg0: i32) -> (i32, i32) {
    %c0_i32 = arith.constant 0 : i32
    %c0_i32_0 = arith.constant 0 : i32
    %c0_i32_1 = arith.constant 0 : i32
    return %c0_i32, %c0_i32_0 : i32, i32
  }
  func.func @transform_12(%arg0: i32) -> (i32, i32, i32) {
    %c0_i32 = arith.constant 0 : i32
    %c0_i32_0 = arith.constant 0 : i32
    %c0_i32_1 = arith.constant 0 : i32
    return %arg0, %c0_i32, %c0_i32_0 : i32, i32, i32
  }
}

module attributes {stable_mosaic.version = 11 : i64} {
  func.func @_detector_kernel(%arg0: i32, %arg1: memref<1x9x9x16xf32, #tpu.memory_space<vmem>>, %arg2: memref<64x16xbf16, #tpu.memory_space<vmem>>, %arg3: memref<1x16xf32, #tpu.memory_space<vmem>>, %arg4: memref<144x32xbf16, #tpu.memory_space<vmem>>, %arg5: memref<1x32xf32, #tpu.memory_space<vmem>>, %arg6: memref<32x128xbf16, #tpu.memory_space<vmem>>, %arg7: memref<1x128xf32, #tpu.memory_space<vmem>>, %arg8: memref<1x4x8x128xf32, #tpu.memory_space<vmem>>, %arg9: memref<10x10x16xf32, #tpu.memory_space<vmem>>) attributes {dimension_semantics = [#tpu.dimension_semantics<parallel>], iteration_bounds = array<i64: 2>, scalar_prefetch = 0 : i64, scratch_operands = 1 : i64, tpu.core_type = #tpu.core_type<tc>, window_params = [{transform_indices = @transform_0, window_bounds = array<i64: 1, 9, 9, 16>}, {pipeline_mode = #tpu.pipeline_mode<synchronous>, transform_indices = @transform_1, window_bounds = array<i64: 64, 16>}, {pipeline_mode = #tpu.pipeline_mode<synchronous>, transform_indices = @transform_2, window_bounds = array<i64: 1, 16>}, {pipeline_mode = #tpu.pipeline_mode<synchronous>, transform_indices = @transform_3, window_bounds = array<i64: 144, 32>}, {pipeline_mode = #tpu.pipeline_mode<synchronous>, transform_indices = @transform_4, window_bounds = array<i64: 1, 32>}, {pipeline_mode = #tpu.pipeline_mode<synchronous>, transform_indices = @transform_5, window_bounds = array<i64: 32, 128>}, {pipeline_mode = #tpu.pipeline_mode<synchronous>, transform_indices = @transform_6, window_bounds = array<i64: 1, 128>}, {transform_indices = @transform_7, window_bounds = array<i64: 1, 4, 8, 128>}]} {
    %c0 = arith.constant 0 : index
    %c0_0 = arith.constant 0 : index
    %c0_1 = arith.constant 0 : index
    %c0_2 = arith.constant 0 : index
    %0 = vector.load %arg1[%c0, %c0_0, %c0_1, %c0_2] : memref<1x9x9x16xf32, #tpu.memory_space<vmem>>, vector<1x9x9x16xf32>
    %1 = vector.shape_cast %0 : vector<1x9x9x16xf32> to vector<9x9x16xf32>
    %2 = vector.extract_strided_slice %1 {offsets = [0, 0, 0], sizes = [8, 8, 16], strides = [1, 1, 1]} : vector<9x9x16xf32> to vector<8x8x16xf32>
    %3 = vector.extract_strided_slice %1 {offsets = [0, 1, 0], sizes = [8, 8, 16], strides = [1, 1, 1]} : vector<9x9x16xf32> to vector<8x8x16xf32>
    %4 = vector.extract_strided_slice %1 {offsets = [1, 0, 0], sizes = [8, 8, 16], strides = [1, 1, 1]} : vector<9x9x16xf32> to vector<8x8x16xf32>
    %5 = vector.extract_strided_slice %1 {offsets = [1, 1, 0], sizes = [8, 8, 16], strides = [1, 1, 1]} : vector<9x9x16xf32> to vector<8x8x16xf32>
    %6 = tpu.concatenate %2, %3, %4, %5 in 2 : vector<8x8x16xf32>, vector<8x8x16xf32>, vector<8x8x16xf32>, vector<8x8x16xf32> -> vector<8x8x64xf32>
    %7 = vector.shape_cast %6 : vector<8x8x64xf32> to vector<64x64xf32>
    %8 = arith.truncf %7 : vector<64x64xf32> to vector<64x64xbf16>
    %c0_3 = arith.constant 0 : index
    %c0_4 = arith.constant 0 : index
    %9 = vector.load %arg2[%c0_3, %c0_4] : memref<64x16xbf16, #tpu.memory_space<vmem>>, vector<64x16xbf16>
    %cst = arith.constant dense<0.000000e+00> : vector<64x16xf32>
    %10 = tpu.matmul %8, %9, %cst {dimension_numbers = #tpu.dot_dimension_numbers<[1], [0], [0], [1], [0, 0, 1, 1], [], []>} : vector<64x64xbf16>, vector<64x16xbf16>, vector<64x16xf32> -> vector<64x16xf32>
    %c0_5 = arith.constant 0 : index
    %c0_6 = arith.constant 0 : index
    %11 = vector.load %arg3[%c0_5, %c0_6] : memref<1x16xf32, #tpu.memory_space<vmem>>, vector<1x16xf32>
    %12 = vector.broadcast %11 : vector<1x16xf32> to vector<64x16xf32>
    %13 = arith.addf %10, %12 : vector<64x16xf32>
    %14 = arith.negf %13 : vector<64x16xf32>
    %15 = math.exp %14 : vector<64x16xf32>
    %cst_7 = arith.constant 1.000000e+00 : f32
    %16 = vector.broadcast %cst_7 : f32 to vector<64x16xf32>
    %17 = arith.addf %16, %15 : vector<64x16xf32>
    %18 = arith.divf %16, %17 : vector<64x16xf32>
    %19 = arith.mulf %13, %18 : vector<64x16xf32>
    %cst_8 = arith.constant 0.000000e+00 : f32
    %20 = vector.broadcast %cst_8 : f32 to vector<10x10x16xf32>
    %c0_9 = arith.constant 0 : index
    %c0_10 = arith.constant 0 : index
    %c0_11 = arith.constant 0 : index
    %21 = vector.load %arg9[%c0_9, %c0_10, %c0_11] : memref<10x10x16xf32, #tpu.memory_space<vmem>>, vector<10x10x16xf32>
    tpu.vector_store %arg9[%c0_9, %c0_10, %c0_11], %20 {strides = array<i32>} : memref<10x10x16xf32, #tpu.memory_space<vmem>>, vector<10x10x16xf32>,
    %22 = vector.shape_cast %19 : vector<64x16xf32> to vector<8x8x16xf32>
    %c1 = arith.constant 1 : index
    %c1_12 = arith.constant 1 : index
    %c0_13 = arith.constant 0 : index
    %23 = vector.load %arg9[%c1, %c1_12, %c0_13] : memref<10x10x16xf32, #tpu.memory_space<vmem>>, vector<8x8x16xf32>
    tpu.vector_store %arg9[%c1, %c1_12, %c0_13], %22 {strides = array<i32>} : memref<10x10x16xf32, #tpu.memory_space<vmem>>, vector<8x8x16xf32>,
    %c0_14 = arith.constant 0 : index
    %c0_15 = arith.constant 0 : index
    %c0_16 = arith.constant 0 : index
    %24 = vector.load %arg9[%c0_14, %c0_15, %c0_16] : memref<10x10x16xf32, #tpu.memory_space<vmem>>, vector<10x10x16xf32>
    %25 = vector.extract_strided_slice %24 {offsets = [0, 0, 0], sizes = [8, 10, 16], strides = [1, 1, 1]} : vector<10x10x16xf32> to vector<8x10x16xf32>
    %26 = vector.shape_cast %25 : vector<8x10x16xf32> to vector<4x2x10x16xf32>
    %27 = vector.extract_strided_slice %26 {offsets = [0, 0, 0, 0], sizes = [4, 1, 10, 16], strides = [1, 1, 1, 1]} : vector<4x2x10x16xf32> to vector<4x1x10x16xf32>
    %28 = vector.shape_cast %27 : vector<4x1x10x16xf32> to vector<4x10x16xf32>
    %29 = vector.extract_strided_slice %28 {offsets = [0, 0, 0], sizes = [4, 8, 16], strides = [1, 1, 1]} : vector<4x10x16xf32> to vector<4x8x16xf32>
    %30 = vector.extract_strided_slice %28 {offsets = [0, 1, 0], sizes = [4, 8, 16], strides = [1, 1, 1]} : vector<4x10x16xf32> to vector<4x8x16xf32>
    %31 = vector.extract_strided_slice %28 {offsets = [0, 2, 0], sizes = [4, 8, 16], strides = [1, 1, 1]} : vector<4x10x16xf32> to vector<4x8x16xf32>
    %32 = vector.extract_strided_slice %24 {offsets = [1, 0, 0], sizes = [8, 10, 16], strides = [1, 1, 1]} : vector<10x10x16xf32> to vector<8x10x16xf32>
    %33 = vector.shape_cast %32 : vector<8x10x16xf32> to vector<4x2x10x16xf32>
    %34 = vector.extract_strided_slice %33 {offsets = [0, 0, 0, 0], sizes = [4, 1, 10, 16], strides = [1, 1, 1, 1]} : vector<4x2x10x16xf32> to vector<4x1x10x16xf32>
    %35 = vector.shape_cast %34 : vector<4x1x10x16xf32> to vector<4x10x16xf32>
    %36 = vector.extract_strided_slice %35 {offsets = [0, 0, 0], sizes = [4, 8, 16], strides = [1, 1, 1]} : vector<4x10x16xf32> to vector<4x8x16xf32>
    %37 = vector.extract_strided_slice %35 {offsets = [0, 1, 0], sizes = [4, 8, 16], strides = [1, 1, 1]} : vector<4x10x16xf32> to vector<4x8x16xf32>
    %38 = vector.extract_strided_slice %35 {offsets = [0, 2, 0], sizes = [4, 8, 16], strides = [1, 1, 1]} : vector<4x10x16xf32> to vector<4x8x16xf32>
    %39 = vector.extract_strided_slice %24 {offsets = [2, 0, 0], sizes = [8, 10, 16], strides = [1, 1, 1]} : vector<10x10x16xf32> to vector<8x10x16xf32>
    %40 = vector.shape_cast %39 : vector<8x10x16xf32> to vector<4x2x10x16xf32>
    %41 = vector.extract_strided_slice %40 {offsets = [0, 0, 0, 0], sizes = [4, 1, 10, 16], strides = [1, 1, 1, 1]} : vector<4x2x10x16xf32> to vector<4x1x10x16xf32>
    %42 = vector.shape_cast %41 : vector<4x1x10x16xf32> to vector<4x10x16xf32>
    %43 = vector.extract_strided_slice %42 {offsets = [0, 0, 0], sizes = [4, 8, 16], strides = [1, 1, 1]} : vector<4x10x16xf32> to vector<4x8x16xf32>
    %44 = vector.extract_strided_slice %42 {offsets = [0, 1, 0], sizes = [4, 8, 16], strides = [1, 1, 1]} : vector<4x10x16xf32> to vector<4x8x16xf32>
    %45 = vector.extract_strided_slice %42 {offsets = [0, 2, 0], sizes = [4, 8, 16], strides = [1, 1, 1]} : vector<4x10x16xf32> to vector<4x8x16xf32>
    %46 = tpu.concatenate %29, %30, %31, %36, %37, %38, %43, %44, %45 in 2 : vector<4x8x16xf32>, vector<4x8x16xf32>, vector<4x8x16xf32>, vector<4x8x16xf32>, vector<4x8x16xf32>, vector<4x8x16xf32>, vector<4x8x16xf32>, vector<4x8x16xf32>, vector<4x8x16xf32> -> vector<4x8x144xf32>
    %47 = vector.shape_cast %46 : vector<4x8x144xf32> to vector<32x144xf32>
    %48 = arith.truncf %47 : vector<32x144xf32> to vector<32x144xbf16>
    %c0_17 = arith.constant 0 : index
    %c0_18 = arith.constant 0 : index
    %49 = vector.load %arg4[%c0_17, %c0_18] : memref<144x32xbf16, #tpu.memory_space<vmem>>, vector<144x32xbf16>
    %cst_19 = arith.constant dense<0.000000e+00> : vector<32x32xf32>
    %50 = tpu.matmul %48, %49, %cst_19 {dimension_numbers = #tpu.dot_dimension_numbers<[1], [0], [0], [1], [0, 0, 1, 1], [], []>} : vector<32x144xbf16>, vector<144x32xbf16>, vector<32x32xf32> -> vector<32x32xf32>
    %c0_20 = arith.constant 0 : index
    %c0_21 = arith.constant 0 : index
    %51 = vector.load %arg5[%c0_20, %c0_21] : memref<1x32xf32, #tpu.memory_space<vmem>>, vector<1x32xf32>
    %52 = vector.broadcast %51 : vector<1x32xf32> to vector<32x32xf32>
    %53 = arith.addf %50, %52 : vector<32x32xf32>
    %54 = arith.negf %53 : vector<32x32xf32>
    %55 = math.exp %54 : vector<32x32xf32>
    %cst_22 = arith.constant 1.000000e+00 : f32
    %56 = vector.broadcast %cst_22 : f32 to vector<32x32xf32>
    %57 = arith.addf %56, %55 : vector<32x32xf32>
    %58 = arith.divf %56, %57 : vector<32x32xf32>
    %59 = arith.mulf %53, %58 : vector<32x32xf32>
    %60 = arith.truncf %59 : vector<32x32xf32> to vector<32x32xbf16>
    %c0_23 = arith.constant 0 : index
    %c0_24 = arith.constant 0 : index
    %61 = vector.load %arg6[%c0_23, %c0_24] : memref<32x128xbf16, #tpu.memory_space<vmem>>, vector<32x128xbf16>
    %cst_25 = arith.constant dense<0.000000e+00> : vector<32x128xf32>
    %62 = tpu.matmul %60, %61, %cst_25 {dimension_numbers = #tpu.dot_dimension_numbers<[1], [0], [0], [1], [0, 0, 1, 1], [], []>} : vector<32x32xbf16>, vector<32x128xbf16>, vector<32x128xf32> -> vector<32x128xf32>
    %c0_26 = arith.constant 0 : index
    %c0_27 = arith.constant 0 : index
    %63 = vector.load %arg7[%c0_26, %c0_27] : memref<1x128xf32, #tpu.memory_space<vmem>>, vector<1x128xf32>
    %64 = vector.broadcast %63 : vector<1x128xf32> to vector<32x128xf32>
    %65 = arith.addf %62, %64 : vector<32x128xf32>
    %66 = vector.shape_cast %65 : vector<32x128xf32> to vector<4x8x128xf32>
    %c0_28 = arith.constant 0 : index
    %c0_29 = arith.constant 0 : index
    %c0_30 = arith.constant 0 : index
    %c0_31 = arith.constant 0 : index
    %67 = vector.load %arg8[%c0_28, %c0_29, %c0_30, %c0_31] : memref<1x4x8x128xf32, #tpu.memory_space<vmem>>, vector<1x4x8x128xf32>
    %68 = vector.shape_cast %67 : vector<1x4x8x128xf32> to vector<4x8x128xf32>
    %69 = vector.shape_cast %66 : vector<4x8x128xf32> to vector<1x4x8x128xf32>
    tpu.vector_store %arg8[%c0_28, %c0_29, %c0_30, %c0_31], %69 {strides = array<i32>} : memref<1x4x8x128xf32, #tpu.memory_space<vmem>>, vector<1x4x8x128xf32>,
    return
  }
  func.func @transform_0(%arg0: i32) -> (i32, i32, i32, i32) {
    %c0_i32 = arith.constant 0 : i32
    %c0_i32_0 = arith.constant 0 : i32
    %c0_i32_1 = arith.constant 0 : i32
    %c0_i32_2 = arith.constant 0 : i32
    return %arg0, %c0_i32, %c0_i32_0, %c0_i32_1 : i32, i32, i32, i32
  }
  func.func @transform_1(%arg0: i32) -> (i32, i32) {
    %c0_i32 = arith.constant 0 : i32
    %c0_i32_0 = arith.constant 0 : i32
    %c0_i32_1 = arith.constant 0 : i32
    return %c0_i32, %c0_i32_0 : i32, i32
  }
  func.func @transform_2(%arg0: i32) -> (i32, i32) {
    %c0_i32 = arith.constant 0 : i32
    %c0_i32_0 = arith.constant 0 : i32
    %c0_i32_1 = arith.constant 0 : i32
    return %c0_i32, %c0_i32_0 : i32, i32
  }
  func.func @transform_3(%arg0: i32) -> (i32, i32) {
    %c0_i32 = arith.constant 0 : i32
    %c0_i32_0 = arith.constant 0 : i32
    %c0_i32_1 = arith.constant 0 : i32
    return %c0_i32, %c0_i32_0 : i32, i32
  }
  func.func @transform_4(%arg0: i32) -> (i32, i32) {
    %c0_i32 = arith.constant 0 : i32
    %c0_i32_0 = arith.constant 0 : i32
    %c0_i32_1 = arith.constant 0 : i32
    return %c0_i32, %c0_i32_0 : i32, i32
  }
  func.func @transform_5(%arg0: i32) -> (i32, i32) {
    %c0_i32 = arith.constant 0 : i32
    %c0_i32_0 = arith.constant 0 : i32
    %c0_i32_1 = arith.constant 0 : i32
    return %c0_i32, %c0_i32_0 : i32, i32
  }
  func.func @transform_6(%arg0: i32) -> (i32, i32) {
    %c0_i32 = arith.constant 0 : i32
    %c0_i32_0 = arith.constant 0 : i32
    %c0_i32_1 = arith.constant 0 : i32
    return %c0_i32, %c0_i32_0 : i32, i32
  }
  func.func @transform_7(%arg0: i32) -> (i32, i32, i32, i32) {
    %c0_i32 = arith.constant 0 : i32
    %c0_i32_0 = arith.constant 0 : i32
    %c0_i32_1 = arith.constant 0 : i32
    %c0_i32_2 = arith.constant 0 : i32
    return %arg0, %c0_i32, %c0_i32_0, %c0_i32_1 : i32, i32, i32, i32
  }
}

</mosaic_0001>

<llo_original>
// kernel: trans_weather_yolov6.2
$region0: #{trans_weather_yolov6.2}
  #allocation0 [shape = 'u32[]', space=smem, size = 0x4, offset = 0x4, fixed_abs, tag = 'smem constant byte address 0x4 - core index']
  #allocation1 [shape = 'u32[144,128]{1,0:T(1,128)}', space=vmem, size = 0x12000, scoped, tag = 'internal scratch']
  %s0 = inlined_call_operand.vmem [shape: bf16[2,16,64], index: 0, kind: input, shape index: {}]
  %s1 = inlined_call_operand.vmem [shape: bf16[64,128], index: 1, kind: input, shape index: {}]
  %s2 = inlined_call_operand.vmem [shape: f32[1,128], index: 2, kind: input, shape index: {}]
  %s3 = inlined_call_operand.vmem [shape: f32[4,128], index: 3, kind: input, shape index: {}]
  %s4 = inlined_call_operand.vmem [shape: bf16[128,384], index: 4, kind: input, shape index: {}]
  %s5 = inlined_call_operand.vmem [shape: bf16[128,128], index: 5, kind: input, shape index: {}]
  %s6 = inlined_call_operand.vmem [shape: bf16[128,128], index: 6, kind: input, shape index: {}]
  %s7 = inlined_call_operand.vmem [shape: f32[1,128], index: 7, kind: input, shape index: {}]
  %s8 = inlined_call_operand.vmem [shape: bf16[128,128], index: 8, kind: input, shape index: {}]
  %s9 = inlined_call_operand.vmem [shape: f32[1,128], index: 9, kind: input, shape index: {}]
  %s10 = inlined_call_operand.vmem [shape: bf16[128,128], index: 10, kind: input, shape index: {}]
  %s11 = inlined_call_operand.vmem [shape: f32[1,128], index: 11, kind: input, shape index: {}]
  %s12 = inlined_call_operand.vmem [shape: f32[2,16,128], index: 12, kind: output, shape index: {}]
  %s13 = sld [smem:[#allocation0]]
  $region58: #{trans_weather_yolov6.2} parent=0
    _
  %s15 = ssub.s32 1, %s13
  %s16 = scalar_select 0, %s15, %s13
  // Predicated region
  $region2: #{trans_weather_yolov6.2} parent=0 // pred_check
    _
  $region3: #{trans_weather_yolov6.2} parent=0 // pred_check_branch
    %18 = sbr.rel (0) target = $region5
  $region4: #{trans_weather_yolov6.2} parent=0 // pred_region
    _
  $region5: #{trans_weather_yolov6.2} parent=0 // pred_fallthru
    _
  // Predicated region
  $region6: #{trans_weather_yolov6.2} parent=0 // pred_check
    _
  $region7: #{trans_weather_yolov6.2} parent=0 // pred_check_branch
    %20 = sbr.rel (0) target = $region9
  $region8: #{trans_weather_yolov6.2} parent=0 // pred_region
    _
  $region9: #{trans_weather_yolov6.2} parent=0 // pred_fallthru
    _
  // Predicated region
  $region10: #{trans_weather_yolov6.2} parent=0 // pred_check
    _
  $region11: #{trans_weather_yolov6.2} parent=0 // pred_check_branch
    %22 = sbr.rel (0) target = $region13
  $region12: #{trans_weather_yolov6.2} parent=0 // pred_region
    _
  $region13: #{trans_weather_yolov6.2} parent=0 // pred_fallthru
    _
  // Predicated region
  $region14: #{trans_weather_yolov6.2} parent=0 // pred_check
    _
  $region15: #{trans_weather_yolov6.2} parent=0 // pred_check_branch
    %24 = sbr.rel (0) target = $region17
  $region16: #{trans_weather_yolov6.2} parent=0 // pred_region
    _
  $region17: #{trans_weather_yolov6.2} parent=0 // pred_fallthru
    _
  // Predicated region
  $region18: #{trans_weather_yolov6.2} parent=0 // pred_check
    _
  $region19: #{trans_weather_yolov6.2} parent=0 // pred_check_branch
    %26 = sbr.rel (0) target = $region21
  $region20: #{trans_weather_yolov6.2} parent=0 // pred_region
    _
  $region21: #{trans_weather_yolov6.2} parent=0 // pred_fallthru
    _
  // Predicated region
  $region22: #{trans_weather_yolov6.2} parent=0 // pred_check
    _
  $region23: #{trans_weather_yolov6.2} parent=0 // pred_check_branch
    %28 = sbr.rel (0) target = $region25
  $region24: #{trans_weather_yolov6.2} parent=0 // pred_region
    _
  $region25: #{trans_weather_yolov6.2} parent=0 // pred_fallthru
    _
  // Predicated region
  $region26: #{trans_weather_yolov6.2} parent=0 // pred_check
    _
  $region27: #{trans_weather_yolov6.2} parent=0 // pred_check_branch
    %30 = sbr.rel (0) target = $region29
  $region28: #{trans_weather_yolov6.2} parent=0 // pred_region
    _
  $region29: #{trans_weather_yolov6.2} parent=0 // pred_fallthru
    _
  // Predicated region
  $region30: #{trans_weather_yolov6.2} parent=0 // pred_check
    _
  $region31: #{trans_weather_yolov6.2} parent=0 // pred_check_branch
    %32 = sbr.rel (0) target = $region33
  $region32: #{trans_weather_yolov6.2} parent=0 // pred_region
    _
  $region33: #{trans_weather_yolov6.2} parent=0 // pred_fallthru
    _
  // Predicated region
  $region34: #{trans_weather_yolov6.2} parent=0 // pred_check
    _
  $region35: #{trans_weather_yolov6.2} parent=0 // pred_check_branch
    %34 = sbr.rel (0) target = $region37
  $region36: #{trans_weather_yolov6.2} parent=0 // pred_region
    _
  $region37: #{trans_weather_yolov6.2} parent=0 // pred_fallthru
    _
  // Predicated region
  $region38: #{trans_weather_yolov6.2} parent=0 // pred_check
    _
  $region39: #{trans_weather_yolov6.2} parent=0 // pred_check_branch
    %36 = sbr.rel (0) target = $region41
  $region40: #{trans_weather_yolov6.2} parent=0 // pred_region
    _
  $region41: #{trans_weather_yolov6.2} parent=0 // pred_fallthru
    _
  // Predicated region
  $region42: #{trans_weather_yolov6.2} parent=0 // pred_check
    _
  $region43: #{trans_weather_yolov6.2} parent=0 // pred_check_branch
    %38 = sbr.rel (0) target = $region45
  $region44: #{trans_weather_yolov6.2} parent=0 // pred_region
    _
  $region45: #{trans_weather_yolov6.2} parent=0 // pred_fallthru
    _
  // Predicated region
  $region46: #{trans_weather_yolov6.2} parent=0 // pred_check
    _
  $region47: #{trans_weather_yolov6.2} parent=0 // pred_check_branch
    %40 = sbr.rel (0) target = $region49
  $region48: #{trans_weather_yolov6.2} parent=0 // pred_region
    _
  $region49: #{trans_weather_yolov6.2} parent=0 // pred_fallthru
    _
  %v42 = vld [vmem:[%s0] sm:$0xf]
  %v43 = vld [vmem:[%s0 + $0x4] sm:$0xf]
  %v44 = vld [vmem:[%s0 + $0x8] sm:$0xf]
  %v45 = vld [vmem:[%s0 + $0xc] sm:$0xf]
  %v46 = vld [vmem:[%s1] sm:$0xf]
  %v47 = vld [vmem:[%s1 + $0x4] sm:$0xf]
  %v48 = vld [vmem:[%s1 + $0x8] sm:$0xf]
  %v49 = vld [vmem:[%s1 + $0xc] sm:$0xf]
  %v50 = vld [vmem:[%s1 + $0x10] sm:$0xf]
  %v51 = vld [vmem:[%s1 + $0x14] sm:$0xf]
  %v52 = vld [vmem:[%s1 + $0x18] sm:$0xf]
  %v53 = vld [vmem:[%s1 + $0x1c] sm:$0xf]
  %v54 = vld [vmem:[%s2] sm:$0x1]
  %v56 = vlaneseq
  %v57 = vshrl.u32 %v56, 7
  %v58 = vsub.s32 0, %v57
  %v59 = vrot.slane %v54, %v58
  %v65 = vunpack.c.l.b16 %v42
  %v66 = vunpack.c.l.b16 %v43
  %v67 = vunpack.c.l.b16 %v44
  %v68 = vunpack.c.l.b16 %v45
  %v69 = vpack.c.b16 %v66, %v65
  %v70 = vpack.c.b16 %v68, %v67
  %v79 = vunpack.c.l.b16 %v46
  %v80 = vunpack.c.l.b16 %v47
  %v81 = vunpack.c.l.b16 %v48
  %v82 = vunpack.c.l.b16 %v49
  %v83 = vunpack.c.l.b16 %v50
  %v84 = vunpack.c.l.b16 %v51
  %v85 = vunpack.c.l.b16 %v52
  %v86 = vunpack.c.l.b16 %v53
  %v87 = vpack.c.b16 %v80, %v79
  %v88 = vpack.c.b16 %v82, %v81
  %v89 = vpack.c.b16 %v84, %v83
  %v90 = vpack.c.b16 %v86, %v85
  %vm95 = vcmask 523264
  %v97 = vsel %vm95, %v69, 0
  %v100 = vsel %vm95, %v70, 0
  %102 = vmatprep.subr.bf16.mxu0 0
  %103 = vmatpush1.bf16.msra.mxu0 %v87
  %104 = vmatprep.subr.bf16.mxu0 0
  %105 = vmatpush1.bf16.msra.mxu0 %v88
  %106 = vmatprep.subr.bf16.mxu0 0
  %107 = vmatpush1.bf16.msra.mxu0 %v89
  %108 = vmatprep.subr.bf16.mxu0 0
  %109 = vmatpush1.bf16.msra.mxu0 %v90
  %110 = vmatprep.subr.bf16.mxu0 0
  %111 = vmatpush1.bf16.msra.mxu0 0
  %112 = vmatprep.subr.bf16.mxu0 0
  %113 = vmatpush1.bf16.msra.mxu0 0
  %114 = vmatprep.subr.bf16.mxu0 0
  %115 = vmatpush1.bf16.msra.mxu0 0
  %116 = vmatprep.subr.bf16.mxu0 0
  %117 = vmatpush1.bf16.msra.mxu0 0
  %118 = vmatprep.subr.bf16.mxu0 0
  %119 = vmatpush1.bf16.msra.mxu0 0
  %120 = vmatprep.subr.bf16.mxu0 0
  %121 = vmatpush1.bf16.msra.mxu0 0
  %122 = vmatprep.subr.bf16.mxu0 0
  %123 = vmatpush1.bf16.msra.mxu0 0
  %124 = vmatprep.subr.bf16.mxu0 0
  %125 = vmatpush1.bf16.msra.mxu0 0
  %126 = vmatprep.subr.bf16.mxu0 0
  %127 = vmatpush1.bf16.msra.mxu0 0
  %128 = vmatprep.subr.bf16.mxu0 0
  %129 = vmatpush1.bf16.msra.mxu0 0
  %130 = vmatprep.subr.bf16.mxu0 0
  %131 = vmatpush1.bf16.msra.mxu0 0
  %132 = vmatprep.subr.bf16.mxu0 0
  %133 = vmatpush1.bf16.msra.mxu0 0
  %134 = vmatprep.mubr.bf16.mxu0 0
  %135 = vmatmul.mubr.bf16.gmra.mrb[0].mxu0 %v97
  %v136 = vpop.f32.mrb[0].mxu0
  %v137 = vadd.f32 %v59, %v136
  %v138 = vpop.f32.mrb[0].mxu0
  %v139 = vpop.f32.mrb[0].mxu0
  %v140 = vadd.f32 %v59, %v139
  %v141 = vpop.f32.mrb[0].mxu0
  %142 = vmatprep.mubr.bf16.mxu0 0
  %143 = vmatmul.mubr.bf16.gmra.mrb[0].mxu0 %v100
  %v144 = vpop.f32.mrb[0].mxu0
  %v145 = vadd.f32 %v59, %v144
  %v146 = vpop.f32.mrb[0].mxu0
  %v147 = vpop.f32.mrb[0].mxu0
  %v148 = vadd.f32 %v59, %v147
  %v149 = vpop.f32.mrb[0].mxu0
  %150 = vdwg.mxu0
  %v151 = vld [vmem:[%s3] sm:$0xf]
  %152 = vadd.xlane.f32.xlu0 %v137
  %v153 = vpop.xlane.xlu0 %152
  %154 = vadd.xlane.f32.xlu0 %v140
  %v155 = vpop.xlane.xlu0 %154
  %156 = vadd.xlane.f32.xlu0 %v145
  %v157 = vpop.xlane.xlu0 %156
  %158 = vadd.xlane.f32.xlu0 %v148
  %v159 = vpop.xlane.xlu0 %158
  %v160 = vmul.f32 %v153, 0.03125
  %v161 = vmul.f32 %v155, 0.03125
  %v162 = vmul.f32 %v157, 0.03125
  %v163 = vmul.f32 %v159, 0.03125
  %v164 = vmul.f32 %v137, %v137
  %v165 = vmul.f32 %v140, %v140
  %v166 = vmul.f32 %v145, %v145
  %v167 = vmul.f32 %v148, %v148
  %168 = vadd.xlane.f32.xlu0 %v164
  %v169 = vpop.xlane.xlu0 %168
  %170 = vadd.xlane.f32.xlu0 %v165
  %v171 = vpop.xlane.xlu0 %170
  %172 = vadd.xlane.f32.xlu0 %v166
  %v173 = vpop.xlane.xlu0 %172
  %174 = vadd.xlane.f32.xlu0 %v167
  %v175 = vpop.xlane.xlu0 %174
  %v176 = vmul.f32 %v169, 0.03125
  %v177 = vmul.f32 %v171, 0.03125
  %v178 = vmul.f32 %v173, 0.03125
  %v179 = vmul.f32 %v175, 0.03125
  %v180 = vmul.f32 %v160, %v160
  %v181 = vmul.f32 %v161, %v161
  %v182 = vmul.f32 %v162, %v162
  %v183 = vmul.f32 %v163, %v163
  %v184 = vsub.f32 %v176, %v180
  %v185 = vsub.f32 %v177, %v181
  %v186 = vsub.f32 %v178, %v182
  %v187 = vsub.f32 %v179, %v183
  %v188 = vsub.f32 %v137, %v160
  %v189 = vsub.f32 %v140, %v161
  %v190 = vsub.f32 %v145, %v162
  %v191 = vsub.f32 %v148, %v163
  %v192 = vadd.f32 %v184, 1e-05
  %v193 = vadd.f32 %v185, 1e-05
  %v194 = vadd.f32 %v186, 1e-05
  %v195 = vadd.f32 %v187, 1e-05
  %v196 = vrsqrt.pop %v192
  %v197 = vrsqrt.pop %v193
  %v198 = vrsqrt.pop %v194
  %v199 = vrsqrt.pop %v195
  %v200 = vmul.f32 %v188, %v196
  %v201 = vmul.f32 %v189, %v197
  %v202 = vmul.f32 %v190, %v198
  %v203 = vmul.f32 %v191, %v199
  %v204 = vlaneseq
  %v205 = vshrl.u32 %v204, 7
  %v206 = vsub.s32 0, %v205
  %v207 = vrot.slane %v151, %v206
  %v208 = vmul.f32 %v200, %v207
  %v209 = vmul.f32 %v201, %v207
  %v210 = vmul.f32 %v202, %v207
  %v211 = vmul.f32 %v203, %v207
  %v212 = vlaneseq
  %v213 = vshrl.u32 %v212, 7
  %v214 = vsub.s32 1, %v213
  %v215 = vrot.slane %v151, %v214
  %v216 = vadd.f32 %v208, %v215
  %v217 = vadd.f32 %v209, %v215
  %v218 = vadd.f32 %v210, %v215
  %v219 = vadd.f32 %v211, %v215
  %v220 = vpack.c.bf16 %v217, %v216
  %v221 = vpack.c.bf16 %v219, %v218
  %v222 = vld [vmem:[%s4] sm:$0xff]
  %v223 = vld [vmem:[%s4 + $0x8] sm:$0xf]
  %v224 = vld [vmem:[%s4 + $0xc] sm:$0xff]
  %v225 = vld [vmem:[%s4 + $0x14] sm:$0xf]
  %v226 = vld [vmem:[%s4 + $0x18] sm:$0xff]
  %v227 = vld [vmem:[%s4 + $0x20] sm:$0xf]
  %v228 = vld [vmem:[%s4 + $0x24] sm:$0xff]
  %v229 = vld [vmem:[%s4 + $0x2c] sm:$0xf]
  %v230 = vld [vmem:[%s4 + $0x30] sm:$0xff]
  %v231 = vld [vmem:[%s4 + $0x38] sm:$0xf]
  %v232 = vld [vmem:[%s4 + $0x3c] sm:$0xff]
  %v233 = vld [vmem:[%s4 + $0x44] sm:$0xf]
  %v234 = vld [vmem:[%s4 + $0x48] sm:$0xff]
  %v235 = vld [vmem:[%s4 + $0x50] sm:$0xf]
  %v236 = vld [vmem:[%s4 + $0x54] sm:$0xff]
  %v237 = vld [vmem:[%s4 + $0x5c] sm:$0xf]
  %v238 = vld [vmem:[%s4 + $0x60] sm:$0xff]
  %v239 = vld [vmem:[%s4 + $0x68] sm:$0xf]
  %v240 = vld [vmem:[%s4 + $0x6c] sm:$0xff]
  %v241 = vld [vmem:[%s4 + $0x74] sm:$0xf]
  %v242 = vld [vmem:[%s4 + $0x78] sm:$0xff]
  %v243 = vld [vmem:[%s4 + $0x80] sm:$0xf]
  %v244 = vld [vmem:[%s4 + $0x84] sm:$0xff]
  %v245 = vld [vmem:[%s4 + $0x8c] sm:$0xf]
  %v246 = vld [vmem:[%s4 + $0x90] sm:$0xff]
  %v247 = vld [vmem:[%s4 + $0x98] sm:$0xf]
  %v248 = vld [vmem:[%s4 + $0x9c] sm:$0xff]
  %v249 = vld [vmem:[%s4 + $0xa4] sm:$0xf]
  %v250 = vld [vmem:[%s4 + $0xa8] sm:$0xff]
  %v251 = vld [vmem:[%s4 + $0xb0] sm:$0xf]
  %v252 = vld [vmem:[%s4 + $0xb4] sm:$0xff]
  %v253 = vld [vmem:[%s4 + $0xbc] sm:$0xf]
  %v286 = vunpack.c.l.b16 %v222
  %v287 = vunpack.c.h.b16 %v222
  %v288 = vunpack.c.l.b16 %v223
  %v289 = vunpack.c.l.b16 %v224
  %v290 = vunpack.c.h.b16 %v224
  %v291 = vunpack.c.l.b16 %v225
  %v292 = vunpack.c.l.b16 %v226
  %v293 = vunpack.c.h.b16 %v226
  %v294 = vunpack.c.l.b16 %v227
  %v295 = vunpack.c.l.b16 %v228
  %v296 = vunpack.c.h.b16 %v228
  %v297 = vunpack.c.l.b16 %v229
  %v298 = vunpack.c.l.b16 %v230
  %v299 = vunpack.c.h.b16 %v230
  %v300 = vunpack.c.l.b16 %v231
  %v301 = vunpack.c.l.b16 %v232
  %v302 = vunpack.c.h.b16 %v232
  %v303 = vunpack.c.l.b16 %v233
  %v304 = vunpack.c.l.b16 %v234
  %v305 = vunpack.c.h.b16 %v234
  %v306 = vunpack.c.l.b16 %v235
  %v307 = vunpack.c.l.b16 %v236
  %v308 = vunpack.c.h.b16 %v236
  %v309 = vunpack.c.l.b16 %v237
  %v310 = vunpack.c.l.b16 %v238
  %v311 = vunpack.c.h.b16 %v238
  %v312 = vunpack.c.l.b16 %v239
  %v313 = vunpack.c.l.b16 %v240
  %v314 = vunpack.c.h.b16 %v240
  %v315 = vunpack.c.l.b16 %v241
  %v316 = vunpack.c.l.b16 %v242
  %v317 = vunpack.c.h.b16 %v242
  %v318 = vunpack.c.l.b16 %v243
  %v319 = vunpack.c.l.b16 %v244
  %v320 = vunpack.c.h.b16 %v244
  %v321 = vunpack.c.l.b16 %v245
  %v322 = vunpack.c.l.b16 %v246
  %v323 = vunpack.c.h.b16 %v246
  %v324 = vunpack.c.l.b16 %v247
  %v325 = vunpack.c.l.b16 %v248
  %v326 = vunpack.c.h.b16 %v248
  %v327 = vunpack.c.l.b16 %v249
  %v328 = vunpack.c.l.b16 %v250
  %v329 = vunpack.c.h.b16 %v250
  %v330 = vunpack.c.l.b16 %v251
  %v331 = vunpack.c.l.b16 %v252
  %v332 = vunpack.c.h.b16 %v252
  %v333 = vunpack.c.l.b16 %v253
  %v334 = vpack.c.b16 %v289, %v286
  %v335 = vpack.c.b16 %v290, %v287
  %v336 = vpack.c.b16 %v291, %v288
  %v337 = vpack.c.b16 %v295, %v292
  %v338 = vpack.c.b16 %v296, %v293
  %v339 = vpack.c.b16 %v297, %v294
  %v340 = vpack.c.b16 %v301, %v298
  %v341 = vpack.c.b16 %v302, %v299
  %v342 = vpack.c.b16 %v303, %v300
  %v343 = vpack.c.b16 %v307, %v304
  %v344 = vpack.c.b16 %v308, %v305
  %v345 = vpack.c.b16 %v309, %v306
  %v346 = vpack.c.b16 %v313, %v310
  %v347 = vpack.c.b16 %v314, %v311
  %v348 = vpack.c.b16 %v315, %v312
  %v349 = vpack.c.b16 %v319, %v316
  %v350 = vpack.c.b16 %v320, %v317
  %v351 = vpack.c.b16 %v321, %v318
  %v352 = vpack.c.b16 %v325, %v322
  %v353 = vpack.c.b16 %v326, %v323
  %v354 = vpack.c.b16 %v327, %v324
  %v355 = vpack.c.b16 %v331, %v328
  %v356 = vpack.c.b16 %v332, %v329
  %v357 = vpack.c.b16 %v333, %v330
  %382 = vmatprep.subr.bf16.mxu0 %v335
  %383 = vmatpush1.bf16.msra.mxu0 %v334
  %384 = vmatprep.subr.bf16.mxu0 %v338
  %385 = vmatpush1.bf16.msra.mxu0 %v337
  %386 = vmatprep.subr.bf16.mxu0 %v341
  %387 = vmatpush1.bf16.msra.mxu0 %v340
  %388 = vmatprep.subr.bf16.mxu0 %v344
  %389 = vmatpush1.bf16.msra.mxu0 %v343
  %390 = vmatprep.subr.bf16.mxu0 %v347
  %391 = vmatpush1.bf16.msra.mxu0 %v346
  %392 = vmatprep.subr.bf16.mxu0 %v350
  %393 = vmatpush1.bf16.msra.mxu0 %v349
  %394 = vmatprep.subr.bf16.mxu0 %v353
  %395 = vmatpush1.bf16.msra.mxu0 %v352
  %396 = vmatprep.subr.bf16.mxu0 %v356
  %397 = vmatpush1.bf16.msra.mxu0 %v355
  %398 = vmatprep.subr.bf16.mxu0 0
  %399 = vmatpush1.bf16.msra.mxu0 0
  %400 = vmatprep.subr.bf16.mxu0 0
  %401 = vmatpush1.bf16.msra.mxu0 0
  %402 = vmatprep.subr.bf16.mxu0 0
  %403 = vmatpush1.bf16.msra.mxu0 0
  %404 = vmatprep.subr.bf16.mxu0 0
  %405 = vmatpush1.bf16.msra.mxu0 0
  %406 = vmatprep.subr.bf16.mxu0 0
  %407 = vmatpush1.bf16.msra.mxu0 0
  %408 = vmatprep.subr.bf16.mxu0 0
  %409 = vmatpush1.bf16.msra.mxu0 0
  %410 = vmatprep.subr.bf16.mxu0 0
  %411 = vmatpush1.bf16.msra.mxu0 0
  %412 = vmatprep.subr.bf16.mxu0 0
  %413 = vmatpush1.bf16.msra.mxu0 0
  %414 = vmatprep.mubr.bf16.mxu0 0
  %415 = vmatmul.mubr.bf16.gmra.mrb[0].mxu0 %v220
  %v416 = vpop.f32.mrb[0].mxu0
  %v417 = vadd.f32 0.0, %v416
  %v418 = vpop.f32.mrb[0].mxu0
  %v419 = vadd.f32 0.0, %v418
  %v420 = vpop.f32.mrb[0].mxu0
  %v421 = vadd.f32 0.0, %v420
  %v422 = vpop.f32.mrb[0].mxu0
  %v423 = vadd.f32 0.0, %v422
  %424 = vmatprep.mubr.bf16.mxu0 0
  %425 = vmatmul.mubr.bf16.gmra.mrb[0].mxu0 %v221
  %v426 = vpop.f32.mrb[0].mxu0
  %v427 = vadd.f32 0.0, %v426
  %v428 = vpop.f32.mrb[0].mxu0
  %v429 = vadd.f32 0.0, %v428
  %v430 = vpop.f32.mrb[0].mxu0
  %v431 = vadd.f32 0.0, %v430
  %v432 = vpop.f32.mrb[0].mxu0
  %v433 = vadd.f32 0.0, %v432
  %434 = vdwg.mxu0
  %435 = vmatprep.subr.bf16.mxu0 0
  %436 = vmatpush1.bf16.msra.mxu0 %v336
  %437 = vmatprep.subr.bf16.mxu0 0
  %438 = vmatpush1.bf16.msra.mxu0 %v339
  %439 = vmatprep.subr.bf16.mxu0 0
  %440 = vmatpush1.bf16.msra.mxu0 %v342
  %441 = vmatprep.subr.bf16.mxu0 0
  %442 = vmatpush1.bf16.msra.mxu0 %v345
  %443 = vmatprep.subr.bf16.mxu0 0
  %444 = vmatpush1.bf16.msra.mxu0 %v348
  %445 = vmatprep.subr.bf16.mxu0 0
  %446 = vmatpush1.bf16.msra.mxu0 %v351
  %447 = vmatprep.subr.bf16.mxu0 0
  %448 = vmatpush1.bf16.msra.mxu0 %v354
  %449 = vmatprep.subr.bf16.mxu0 0
  %450 = vmatpush1.bf16.msra.mxu0 %v357
  %451 = vmatprep.subr.bf16.mxu0 0
  %452 = vmatpush1.bf16.msra.mxu0 0
  %453 = vmatprep.subr.bf16.mxu0 0
  %454 = vmatpush1.bf16.msra.mxu0 0
  %455 = vmatprep.subr.bf16.mxu0 0
  %456 = vmatpush1.bf16.msra.mxu0 0
  %457 = vmatprep.subr.bf16.mxu0 0
  %458 = vmatpush1.bf16.msra.mxu0 0
  %459 = vmatprep.subr.bf16.mxu0 0
  %460 = vmatpush1.bf16.msra.mxu0 0
  %461 = vmatprep.subr.bf16.mxu0 0
  %462 = vmatpush1.bf16.msra.mxu0 0
  %463 = vmatprep.subr.bf16.mxu0 0
  %464 = vmatpush1.bf16.msra.mxu0 0
  %465 = vmatprep.subr.bf16.mxu0 0
  %466 = vmatpush1.bf16.msra.mxu0 0
  %467 = vmatprep.mubr.bf16.mxu0 0
  %468 = vmatmul.mubr.bf16.gmra.mrb[0].mxu0 %v220
  %v469 = vpop.f32.mrb[0].mxu0
  %v470 = vadd.f32 0.0, %v469
  %v471 = vpop.f32.mrb[0].mxu0
  %v472 = vpop.f32.mrb[0].mxu0
  %v473 = vadd.f32 0.0, %v472
  %v474 = vpop.f32.mrb[0].mxu0
  %475 = vmatprep.mubr.bf16.mxu0 0
  %476 = vmatmul.mubr.bf16.gmra.mrb[0].mxu0 %v221
  %v477 = vpop.f32.mrb[0].mxu0
  %v478 = vadd.f32 0.0, %v477
  %v479 = vpop.f32.mrb[0].mxu0
  %v480 = vpop.f32.mrb[0].mxu0
  %v481 = vadd.f32 0.0, %v480
  %v482 = vpop.f32.mrb[0].mxu0
  %483 = vdwg.mxu0
  %v484 = vpack.c.bf16 %v421, %v417
  %v485 = vpack.c.bf16 %v431, %v427
  %v486 = vpack.c.bf16 %v423, %v419
  %v487 = vpack.c.bf16 %v433, %v429
  %v488 = vpack.c.bf16 %v473, %v470
  %v489 = vpack.c.bf16 %v481, %v478
  %490 = vmatprep.subr.bf16.mxu0 0
  %491 = vmatpush1.bf16.xpose.msra.mxu0 %v486
  %492 = vmatprep.subr.bf16.mxu0 0
  %493 = vmatpush1.bf16.xpose.msra.mxu0 0
  %494 = vmatprep.subr.bf16.mxu0 0
  %495 = vmatpush1.bf16.xpose.msra.mxu0 0
  %496 = vmatprep.subr.bf16.mxu0 0
  %497 = vmatpush1.bf16.xpose.msra.mxu0 0
  %498 = vmatprep.subr.bf16.mxu0 0
  %499 = vmatpush1.bf16.xpose.msra.mxu0 0
  %500 = vmatprep.subr.bf16.mxu0 0
  %501 = vmatpush1.bf16.xpose.msra.mxu0 0
  %502 = vmatprep.subr.bf16.mxu0 0
  %503 = vmatpush1.bf16.xpose.msra.mxu0 0
  %504 = vmatprep.subr.bf16.mxu0 0
  %505 = vmatpush1.bf16.xpose.msra.mxu0 0
  %506 = vmatprep.subr.bf16.mxu0 0
  %507 = vmatpush1.bf16.xpose.msra.mxu0 0
  %508 = vmatprep.subr.bf16.mxu0 0
  %509 = vmatpush1.bf16.xpose.msra.mxu0 0
  %510 = vmatprep.subr.bf16.mxu0 0
  %511 = vmatpush1.bf16.xpose.msra.mxu0 0
  %512 = vmatprep.subr.bf16.mxu0 0
  %513 = vmatpush1.bf16.xpose.msra.mxu0 0
  %514 = vmatprep.subr.bf16.mxu0 0
  %515 = vmatpush1.bf16.xpose.msra.mxu0 0
  %516 = vmatprep.subr.bf16.mxu0 0
  %517 = vmatpush1.bf16.xpose.msra.mxu0 0
  %518 = vmatprep.subr.bf16.mxu0 0
  %519 = vmatpush1.bf16.xpose.msra.mxu0 0
  %520 = vmatprep.subr.bf16.mxu0 0
  %521 = vmatpush1.bf16.xpose.msra.mxu0 0
  %522 = vmatprep.mubr.bf16.mxu0 0
  %523 = vmatmul.mubr.bf16.gmra.mrb[0].mxu0 %v484
  %v524 = vpop.f32.mrb[0].mxu0
  %v525 = vadd.f32 0.0, %v524
  %v526 = vpop.f32.mrb[0].mxu0
  %v527 = vpop.f32.mrb[0].mxu0
  %v528 = vadd.f32 0.0, %v527
  %v529 = vpop.f32.mrb[0].mxu0
  %530 = vdwg.mxu0
  %531 = vmatprep.subr.bf16.mxu0 0
  %532 = vmatpush1.bf16.xpose.msra.mxu0 %v487
  %533 = vmatprep.subr.bf16.mxu0 0
  %534 = vmatpush1.bf16.xpose.msra.mxu0 0
  %535 = vmatprep.subr.bf16.mxu0 0
  %536 = vmatpush1.bf16.xpose.msra.mxu0 0
  %537 = vmatprep.subr.bf16.mxu0 0
  %538 = vmatpush1.bf16.xpose.msra.mxu0 0
  %539 = vmatprep.subr.bf16.mxu0 0
  %540 = vmatpush1.bf16.xpose.msra.mxu0 0
  %541 = vmatprep.subr.bf16.mxu0 0
  %542 = vmatpush1.bf16.xpose.msra.mxu0 0
  %543 = vmatprep.subr.bf16.mxu0 0
  %544 = vmatpush1.bf16.xpose.msra.mxu0 0
  %545 = vmatprep.subr.bf16.mxu0 0
  %546 = vmatpush1.bf16.xpose.msra.mxu0 0
  %547 = vmatprep.subr.bf16.mxu0 0
  %548 = vmatpush1.bf16.xpose.msra.mxu0 0
  %549 = vmatprep.subr.bf16.mxu0 0
  %550 = vmatpush1.bf16.xpose.msra.mxu0 0
  %551 = vmatprep.subr.bf16.mxu0 0
  %552 = vmatpush1.bf16.xpose.msra.mxu0 0
  %553 = vmatprep.subr.bf16.mxu0 0
  %554 = vmatpush1.bf16.xpose.msra.mxu0 0
  %555 = vmatprep.subr.bf16.mxu0 0
  %556 = vmatpush1.bf16.xpose.msra.mxu0 0
  %557 = vmatprep.subr.bf16.mxu0 0
  %558 = vmatpush1.bf16.xpose.msra.mxu0 0
  %559 = vmatprep.subr.bf16.mxu0 0
  %560 = vmatpush1.bf16.xpose.msra.mxu0 0
  %561 = vmatprep.subr.bf16.mxu0 0
  %562 = vmatpush1.bf16.xpose.msra.mxu0 0
  %563 = vmatprep.mubr.bf16.mxu0 0
  %564 = vmatmul.mubr.bf16.gmra.mrb[0].mxu0 %v485
  %v565 = vpop.f32.mrb[0].mxu0
  %v566 = vadd.f32 0.0, %v565
  %v567 = vpop.f32.mrb[0].mxu0
  %v568 = vpop.f32.mrb[0].mxu0
  %v569 = vadd.f32 0.0, %v568
  %v570 = vpop.f32.mrb[0].mxu0
  %571 = vdwg.mxu0
  %vm572 = vcmask 130048
  %v573 = vsel %vm572, %v525, -inf
  %574 = vmax.xlane.f32.xlu0 %v573
  %v575 = vpop.xlane.xlu0 %574
  %v576 = vsel %vm572, %v528, -inf
  %577 = vmax.xlane.f32.xlu0 %v576
  %v578 = vpop.xlane.xlu0 %577
  %v579 = vsel %vm572, %v566, -inf
  %580 = vmax.xlane.f32.xlu0 %v579
  %v581 = vpop.xlane.xlu0 %580
  %v582 = vsel %vm572, %v569, -inf
  %583 = vmax.xlane.f32.xlu0 %v582
  %v584 = vpop.xlane.xlu0 %583
  %v585 = vsub.f32 %v525, %v575
  %v586 = vsub.f32 %v528, %v578
  %v587 = vsub.f32 %v566, %v581
  %v588 = vsub.f32 %v569, %v584
  %v589 = vmul.f32 %v585, 1.442695
  %v590 = vpow.pop %v589
  %v591 = vmul.f32 %v586, 1.442695
  %v592 = vpow.pop %v591
  %v593 = vmul.f32 %v587, 1.442695
  %v594 = vpow.pop %v593
  %v595 = vmul.f32 %v588, 1.442695
  %v596 = vpow.pop %v595
  %v597 = vsel %vm572, %v590, 0.0
  %598 = vadd.xlane.f32.xlu0 %v597
  %v599 = vpop.xlane.xlu0 %598
  %v600 = vsel %vm572, %v592, 0.0
  %601 = vadd.xlane.f32.xlu0 %v600
  %v602 = vpop.xlane.xlu0 %601
  %v603 = vsel %vm572, %v594, 0.0
  %604 = vadd.xlane.f32.xlu0 %v603
  %v605 = vpop.xlane.xlu0 %604
  %v606 = vsel %vm572, %v596, 0.0
  %607 = vadd.xlane.f32.xlu0 %v606
  %v608 = vpop.xlane.xlu0 %607
  %v609 = vrcp.pop %v599
  %v610 = vrcp.pop %v602
  %v611 = vrcp.pop %v605
  %v612 = vrcp.pop %v608
  %v613 = vmul.f32 %v590, %v609
  %v614 = vmul.f32 %v592, %v610
  %v615 = vmul.f32 %v594, %v611
  %v616 = vmul.f32 %v596, %v612
  %v617 = vpack.c.bf16 %v614, %v613
  %v618 = vpack.c.bf16 %v616, %v615
  %v620 = vsel %vm572, %v617, 0
  %622 = vmatprep.subr.bf16.mxu0 0
  %623 = vmatpush1.bf16.msra.mxu0 %v488
  %624 = vmatprep.subr.bf16.mxu0 0
  %625 = vmatpush1.bf16.msra.mxu0 0
  %626 = vmatprep.subr.bf16.mxu0 0
  %627 = vmatpush1.bf16.msra.mxu0 0
  %628 = vmatprep.subr.bf16.mxu0 0
  %629 = vmatpush1.bf16.msra.mxu0 0
  %630 = vmatprep.subr.bf16.mxu0 0
  %631 = vmatpush1.bf16.msra.mxu0 0
  %632 = vmatprep.subr.bf16.mxu0 0
  %633 = vmatpush1.bf16.msra.mxu0 0
  %634 = vmatprep.subr.bf16.mxu0 0
  %635 = vmatpush1.bf16.msra.mxu0 0
  %636 = vmatprep.subr.bf16.mxu0 0
  %637 = vmatpush1.bf16.msra.mxu0 0
  %638 = vmatprep.subr.bf16.mxu0 0
  %639 = vmatpush1.bf16.msra.mxu0 0
  %640 = vmatprep.subr.bf16.mxu0 0
  %641 = vmatpush1.bf16.msra.mxu0 0
  %642 = vmatprep.subr.bf16.mxu0 0
  %643 = vmatpush1.bf16.msra.mxu0 0
  %644 = vmatprep.subr.bf16.mxu0 0
  %645 = vmatpush1.bf16.msra.mxu0 0
  %646 = vmatprep.subr.bf16.mxu0 0
  %647 = vmatpush1.bf16.msra.mxu0 0
  %648 = vmatprep.subr.bf16.mxu0 0
  %649 = vmatpush1.bf16.msra.mxu0 0
  %650 = vmatprep.subr.bf16.mxu0 0
  %651 = vmatpush1.bf16.msra.mxu0 0
  %652 = vmatprep.subr.bf16.mxu0 0
  %653 = vmatpush1.bf16.msra.mxu0 0
  %654 = vmatprep.mubr.bf16.mxu0 0
  %655 = vmatmul.mubr.bf16.gmra.mrb[0].mxu0 %v620
  %v656 = vpop.f32.mrb[0].mxu0
  %v657 = vadd.f32 0.0, %v656
  %v658 = vpop.f32.mrb[0].mxu0
  %v659 = vpop.f32.mrb[0].mxu0
  %v660 = vadd.f32 0.0, %v659
  %v661 = vpop.f32.mrb[0].mxu0
  %662 = vdwg.mxu0
  %v664 = vsel %vm572, %v618, 0
  %666 = vmatprep.subr.bf16.mxu0 0
  %667 = vmatpush1.bf16.msra.mxu0 %v489
  %668 = vmatprep.subr.bf16.mxu0 0
  %669 = vmatpush1.bf16.msra.mxu0 0
  %670 = vmatprep.subr.bf16.mxu0 0
  %671 = vmatpush1.bf16.msra.mxu0 0
  %672 = vmatprep.subr.bf16.mxu0 0
  %673 = vmatpush1.bf16.msra.mxu0 0
  %674 = vmatprep.subr.bf16.mxu0 0
  %675 = vmatpush1.bf16.msra.mxu0 0
  %676 = vmatprep.subr.bf16.mxu0 0
  %677 = vmatpush1.bf16.msra.mxu0 0
  %678 = vmatprep.subr.bf16.mxu0 0
  %679 = vmatpush1.bf16.msra.mxu0 0
  %680 = vmatprep.subr.bf16.mxu0 0
  %681 = vmatpush1.bf16.msra.mxu0 0
  %682 = vmatprep.subr.bf16.mxu0 0
  %683 = vmatpush1.bf16.msra.mxu0 0
  %684 = vmatprep.subr.bf16.mxu0 0
  %685 = vmatpush1.bf16.msra.mxu0 0
  %686 = vmatprep.subr.bf16.mxu0 0
  %687 = vmatpush1.bf16.msra.mxu0 0
  %688 = vmatprep.subr.bf16.mxu0 0
  %689 = vmatpush1.bf16.msra.mxu0 0
  %690 = vmatprep.subr.bf16.mxu0 0
  %691 = vmatpush1.bf16.msra.mxu0 0
  %692 = vmatprep.subr.bf16.mxu0 0
  %693 = vmatpush1.bf16.msra.mxu0 0
  %694 = vmatprep.subr.bf16.mxu0 0
  %695 = vmatpush1.bf16.msra.mxu0 0
  %696 = vmatprep.subr.bf16.mxu0 0
  %697 = vmatpush1.bf16.msra.mxu0 0
  %698 = vmatprep.mubr.bf16.mxu0 0
  %699 = vmatmul.mubr.bf16.gmra.mrb[0].mxu0 %v664
  %v700 = vpop.f32.mrb[0].mxu0
  %v701 = vadd.f32 0.0, %v700
  %v702 = vpop.f32.mrb[0].mxu0
  %v703 = vpop.f32.mrb[0].mxu0
  %v704 = vadd.f32 0.0, %v703
  %v705 = vpop.f32.mrb[0].mxu0
  %706 = vdwg.mxu0
  %v707 = vpack.c.bf16 %v660, %v657
  %v708 = vpack.c.bf16 %v704, %v701
  %v709 = vld [vmem:[%s5] sm:$0xf]
  %v710 = vld [vmem:[%s5 + $0x4] sm:$0xf]
  %v711 = vld [vmem:[%s5 + $0x8] sm:$0xf]
  %v712 = vld [vmem:[%s5 + $0xc] sm:$0xf]
  %v713 = vld [vmem:[%s5 + $0x10] sm:$0xf]
  %v714 = vld [vmem:[%s5 + $0x14] sm:$0xf]
  %v715 = vld [vmem:[%s5 + $0x18] sm:$0xf]
  %v716 = vld [vmem:[%s5 + $0x1c] sm:$0xf]
  %v717 = vld [vmem:[%s5 + $0x20] sm:$0xf]
  %v718 = vld [vmem:[%s5 + $0x24] sm:$0xf]
  %v719 = vld [vmem:[%s5 + $0x28] sm:$0xf]
  %v720 = vld [vmem:[%s5 + $0x2c] sm:$0xf]
  %v721 = vld [vmem:[%s5 + $0x30] sm:$0xf]
  %v722 = vld [vmem:[%s5 + $0x34] sm:$0xf]
  %v723 = vld [vmem:[%s5 + $0x38] sm:$0xf]
  %v724 = vld [vmem:[%s5 + $0x3c] sm:$0xf]
  %v741 = vunpack.c.l.b16 %v709
  %v742 = vunpack.c.l.b16 %v710
  %v743 = vunpack.c.l.b16 %v711
  %v744 = vunpack.c.l.b16 %v712
  %v745 = vunpack.c.l.b16 %v713
  %v746 = vunpack.c.l.b16 %v714
  %v747 = vunpack.c.l.b16 %v715
  %v748 = vunpack.c.l.b16 %v716
  %v749 = vunpack.c.l.b16 %v717
  %v750 = vunpack.c.l.b16 %v718
  %v751 = vunpack.c.l.b16 %v719
  %v752 = vunpack.c.l.b16 %v720
  %v753 = vunpack.c.l.b16 %v721
  %v754 = vunpack.c.l.b16 %v722
  %v755 = vunpack.c.l.b16 %v723
  %v756 = vunpack.c.l.b16 %v724
  %v757 = vpack.c.b16 %v742, %v741
  %v758 = vpack.c.b16 %v744, %v743
  %v759 = vpack.c.b16 %v746, %v745
  %v760 = vpack.c.b16 %v748, %v747
  %v761 = vpack.c.b16 %v750, %v749
  %v762 = vpack.c.b16 %v752, %v751
  %v763 = vpack.c.b16 %v754, %v753
  %v764 = vpack.c.b16 %v756, %v755
  %773 = vmatprep.subr.bf16.mxu0 0
  %774 = vmatpush1.bf16.msra.mxu0 %v757
  %775 = vmatprep.subr.bf16.mxu0 0
  %776 = vmatpush1.bf16.msra.mxu0 %v758
  %777 = vmatprep.subr.bf16.mxu0 0
  %778 = vmatpush1.bf16.msra.mxu0 %v759
  %779 = vmatprep.subr.bf16.mxu0 0
  %780 = vmatpush1.bf16.msra.mxu0 %v760
  %781 = vmatprep.subr.bf16.mxu0 0
  %782 = vmatpush1.bf16.msra.mxu0 %v761
  %783 = vmatprep.subr.bf16.mxu0 0
  %784 = vmatpush1.bf16.msra.mxu0 %v762
  %785 = vmatprep.subr.bf16.mxu0 0
  %786 = vmatpush1.bf16.msra.mxu0 %v763
  %787 = vmatprep.subr.bf16.mxu0 0
  %788 = vmatpush1.bf16.msra.mxu0 %v764
  %789 = vmatprep.subr.bf16.mxu0 0
  %790 = vmatpush1.bf16.msra.mxu0 0
  %791 = vmatprep.subr.bf16.mxu0 0
  %792 = vmatpush1.bf16.msra.mxu0 0
  %793 = vmatprep.subr.bf16.mxu0 0
  %794 = vmatpush1.bf16.msra.mxu0 0
  %795 = vmatprep.subr.bf16.mxu0 0
  %796 = vmatpush1.bf16.msra.mxu0 0
  %797 = vmatprep.subr.bf16.mxu0 0
  %798 = vmatpush1.bf16.msra.mxu0 0
  %799 = vmatprep.subr.bf16.mxu0 0
  %800 = vmatpush1.bf16.msra.mxu0 0
  %801 = vmatprep.subr.bf16.mxu0 0
  %802 = vmatpush1.bf16.msra.mxu0 0
  %803 = vmatprep.subr.bf16.mxu0 0
  %804 = vmatpush1.bf16.msra.mxu0 0
  %805 = vmatprep.mubr.bf16.mxu0 0
  %806 = vmatmul.mubr.bf16.gmra.mrb[0].mxu0 %v707
  %v807 = vpop.f32.mrb[0].mxu0
  %v808 = vadd.f32 0.0, %v807
  %v809 = vpop.f32.mrb[0].mxu0
  %v810 = vpop.f32.mrb[0].mxu0
  %v811 = vadd.f32 0.0, %v810
  %v812 = vpop.f32.mrb[0].mxu0
  %813 = vmatprep.mubr.bf16.mxu0 0
  %814 = vmatmul.mubr.bf16.gmra.mrb[0].mxu0 %v708
  %v815 = vpop.f32.mrb[0].mxu0
  %v816 = vadd.f32 0.0, %v815
  %v817 = vpop.f32.mrb[0].mxu0
  %v818 = vpop.f32.mrb[0].mxu0
  %v819 = vadd.f32 0.0, %v818
  %v820 = vpop.f32.mrb[0].mxu0
  %821 = vdwg.mxu0
  %v822 = vadd.f32 %v137, %v808
  %v823 = vadd.f32 %v140, %v811
  %v824 = vadd.f32 %v145, %v816
  %v825 = vadd.f32 %v148, %v819
  %826 = vadd.xlane.f32.xlu0 %v822
  %v827 = vpop.xlane.xlu0 %826
  %828 = vadd.xlane.f32.xlu0 %v823
  %v829 = vpop.xlane.xlu0 %828
  %830 = vadd.xlane.f32.xlu0 %v824
  %v831 = vpop.xlane.xlu0 %830
  %832 = vadd.xlane.f32.xlu0 %v825
  %v833 = vpop.xlane.xlu0 %832
  %v834 = vmul.f32 %v827, 0.03125
  %v835 = vmul.f32 %v829, 0.03125
  %v836 = vmul.f32 %v831, 0.03125
  %v837 = vmul.f32 %v833, 0.03125
  %v838 = vmul.f32 %v822, %v822
  %v839 = vmul.f32 %v823, %v823
  %v840 = vmul.f32 %v824, %v824
  %v841 = vmul.f32 %v825, %v825
  %842 = vadd.xlane.f32.xlu0 %v838
  %v843 = vpop.xlane.xlu0 %842
  %844 = vadd.xlane.f32.xlu0 %v839
  %v845 = vpop.xlane.xlu0 %844
  %846 = vadd.xlane.f32.xlu0 %v840
  %v847 = vpop.xlane.xlu0 %846
  %848 = vadd.xlane.f32.xlu0 %v841
  %v849 = vpop.xlane.xlu0 %848
  %v850 = vmul.f32 %v843, 0.03125
  %v851 = vmul.f32 %v845, 0.03125
  %v852 = vmul.f32 %v847, 0.03125
  %v853 = vmul.f32 %v849, 0.03125
  %v854 = vmul.f32 %v834, %v834
  %v855 = vmul.f32 %v835, %v835
  %v856 = vmul.f32 %v836, %v836
  %v857 = vmul.f32 %v837, %v837
  %v858 = vsub.f32 %v850, %v854
  %v859 = vsub.f32 %v851, %v855
  %v860 = vsub.f32 %v852, %v856
  %v861 = vsub.f32 %v853, %v857
  %v862 = vsub.f32 %v822, %v834
  %v863 = vsub.f32 %v823, %v835
  %v864 = vsub.f32 %v824, %v836
  %v865 = vsub.f32 %v825, %v837
  %v866 = vadd.f32 %v858, 1e-05
  %v867 = vadd.f32 %v859, 1e-05
  %v868 = vadd.f32 %v860, 1e-05
  %v869 = vadd.f32 %v861, 1e-05
  %v870 = vrsqrt.pop %v866
  %v871 = vrsqrt.pop %v867
  %v872 = vrsqrt.pop %v868
  %v873 = vrsqrt.pop %v869
  %v874 = vmul.f32 %v862, %v870
  %v875 = vmul.f32 %v863, %v871
  %v876 = vmul.f32 %v864, %v872
  %v877 = vmul.f32 %v865, %v873
  %v878 = vlaneseq
  %v879 = vshrl.u32 %v878, 7
  %v880 = vsub.s32 2, %v879
  %v881 = vrot.slane %v151, %v880
  %v882 = vmul.f32 %v874, %v881
  %v883 = vmul.f32 %v875, %v881
  %v884 = vmul.f32 %v876, %v881
  %v885 = vmul.f32 %v877, %v881
  %v886 = vlaneseq
  %v887 = vshrl.u32 %v886, 7
  %v888 = vsub.s32 3, %v887
  %v889 = vrot.slane %v151, %v888
  %v890 = vadd.f32 %v882, %v889
  %v891 = vadd.f32 %v883, %v889
  %v892 = vadd.f32 %v884, %v889
  %v893 = vadd.f32 %v885, %v889
  %v894 = vpack.c.bf16 %v891, %v890
  %v895 = vpack.c.bf16 %v893, %v892
  %v896 = vld [vmem:[%s6] sm:$0xf]
  %v897 = vld [vmem:[%s6 + $0x4] sm:$0xf]
  %v898 = vld [vmem:[%s6 + $0x8] sm:$0xf]
  %v899 = vld [vmem:[%s6 + $0xc] sm:$0xf]
  %v900 = vld [vmem:[%s6 + $0x10] sm:$0xf]
  %v901 = vld [vmem:[%s6 + $0x14] sm:$0xf]
  %v902 = vld [vmem:[%s6 + $0x18] sm:$0xf]
  %v903 = vld [vmem:[%s6 + $0x1c] sm:$0xf]
  %v904 = vld [vmem:[%s6 + $0x20] sm:$0xf]
  %v905 = vld [vmem:[%s6 + $0x24] sm:$0xf]
  %v906 = vld [vmem:[%s6 + $0x28] sm:$0xf]
  %v907 = vld [vmem:[%s6 + $0x2c] sm:$0xf]
  %v908 = vld [vmem:[%s6 + $0x30] sm:$0xf]
  %v909 = vld [vmem:[%s6 + $0x34] sm:$0xf]
  %v910 = vld [vmem:[%s6 + $0x38] sm:$0xf]
  %v911 = vld [vmem:[%s6 + $0x3c] sm:$0xf]
  %v912 = vld [vmem:[%s7] sm:$0x1]
  %v914 = vlaneseq
  %v915 = vshrl.u32 %v914, 7
  %v916 = vsub.s32 0, %v915
  %v917 = vrot.slane %v912, %v916
  %v935 = vunpack.c.l.b16 %v896
  %v936 = vunpack.c.l.b16 %v897
  %v937 = vunpack.c.l.b16 %v898
  %v938 = vunpack.c.l.b16 %v899
  %v939 = vunpack.c.l.b16 %v900
  %v940 = vunpack.c.l.b16 %v901
  %v941 = vunpack.c.l.b16 %v902
  %v942 = vunpack.c.l.b16 %v903
  %v943 = vunpack.c.l.b16 %v904
  %v944 = vunpack.c.l.b16 %v905
  %v945 = vunpack.c.l.b16 %v906
  %v946 = vunpack.c.l.b16 %v907
  %v947 = vunpack.c.l.b16 %v908
  %v948 = vunpack.c.l.b16 %v909
  %v949 = vunpack.c.l.b16 %v910
  %v950 = vunpack.c.l.b16 %v911
  %v951 = vpack.c.b16 %v936, %v935
  %v952 = vpack.c.b16 %v938, %v937
  %v953 = vpack.c.b16 %v940, %v939
  %v954 = vpack.c.b16 %v942, %v941
  %v955 = vpack.c.b16 %v944, %v943
  %v956 = vpack.c.b16 %v946, %v945
  %v957 = vpack.c.b16 %v948, %v947
  %v958 = vpack.c.b16 %v950, %v949
  %967 = vmatprep.subr.bf16.mxu0 0
  %968 = vmatpush1.bf16.msra.mxu0 %v951
  %969 = vmatprep.subr.bf16.mxu0 0
  %970 = vmatpush1.bf16.msra.mxu0 %v952
  %971 = vmatprep.subr.bf16.mxu0 0
  %972 = vmatpush1.bf16.msra.mxu0 %v953
  %973 = vmatprep.subr.bf16.mxu0 0
  %974 = vmatpush1.bf16.msra.mxu0 %v954
  %975 = vmatprep.subr.bf16.mxu0 0
  %976 = vmatpush1.bf16.msra.mxu0 %v955
  %977 = vmatprep.subr.bf16.mxu0 0
  %978 = vmatpush1.bf16.msra.mxu0 %v956
  %979 = vmatprep.subr.bf16.mxu0 0
  %980 = vmatpush1.bf16.msra.mxu0 %v957
  %981 = vmatprep.subr.bf16.mxu0 0
  %982 = vmatpush1.bf16.msra.mxu0 %v958
  %983 = vmatprep.subr.bf16.mxu0 0
  %984 = vmatpush1.bf16.msra.mxu0 0
  %985 = vmatprep.subr.bf16.mxu0 0
  %986 = vmatpush1.bf16.msra.mxu0 0
  %987 = vmatprep.subr.bf16.mxu0 0
  %988 = vmatpush1.bf16.msra.mxu0 0
  %989 = vmatprep.subr.bf16.mxu0 0
  %990 = vmatpush1.bf16.msra.mxu0 0
  %991 = vmatprep.subr.bf16.mxu0 0
  %992 = vmatpush1.bf16.msra.mxu0 0
  %993 = vmatprep.subr.bf16.mxu0 0
  %994 = vmatpush1.bf16.msra.mxu0 0
  %995 = vmatprep.subr.bf16.mxu0 0
  %996 = vmatpush1.bf16.msra.mxu0 0
  %997 = vmatprep.subr.bf16.mxu0 0
  %998 = vmatpush1.bf16.msra.mxu0 0
  %999 = vmatprep.mubr.bf16.mxu0 0
  %1000 = vmatmul.mubr.bf16.gmra.mrb[0].mxu0 %v894
  %v1001 = vpop.f32.mrb[0].mxu0
  %v1002 = vadd.f32 %v917, %v1001
  %v1003 = vpop.f32.mrb[0].mxu0
  %v1004 = vpop.f32.mrb[0].mxu0
  %v1005 = vadd.f32 %v917, %v1004
  %v1006 = vpop.f32.mrb[0].mxu0
  %1007 = vmatprep.mubr.bf16.mxu0 0
  %1008 = vmatmul.mubr.bf16.gmra.mrb[0].mxu0 %v895
  %v1009 = vpop.f32.mrb[0].mxu0
  %v1010 = vadd.f32 %v917, %v1009
  %v1011 = vpop.f32.mrb[0].mxu0
  %v1012 = vpop.f32.mrb[0].mxu0
  %v1013 = vadd.f32 %v917, %v1012
  %v1014 = vpop.f32.mrb[0].mxu0
  %1015 = vdwg.mxu0
  %v1016 = vmul.f32 %v1002, %v1002
  %v1017 = vmul.f32 %v1005, %v1005
  %v1018 = vmul.f32 %v1010, %v1010
  %v1019 = vmul.f32 %v1013, %v1013
  %v1020 = vmul.f32 %v1002, %v1016
  %v1021 = vmul.f32 %v1005, %v1017
  %v1022 = vmul.f32 %v1010, %v1018
  %v1023 = vmul.f32 %v1013, %v1019
  %v1024 = vmul.f32 %v1020, 0.044715
  %v1025 = vmul.f32 %v1021, 0.044715
  %v1026 = vmul.f32 %v1022, 0.044715
  %v1027 = vmul.f32 %v1023, 0.044715
  %v1028 = vadd.f32 %v1002, %v1024
  %v1029 = vadd.f32 %v1005, %v1025
  %v1030 = vadd.f32 %v1010, %v1026
  %v1031 = vadd.f32 %v1013, %v1027
  %v1032 = vmul.f32 %v1028, 0.7978846
  %v1033 = vmul.f32 %v1029, 0.7978846
  %v1034 = vmul.f32 %v1030, 0.7978846
  %v1035 = vmul.f32 %v1031, 0.7978846
  %v1036 = vtanh.pop %v1032
  %v1037 = vtanh.pop %v1033
  %v1038 = vtanh.pop %v1034
  %v1039 = vtanh.pop %v1035
  %v1040 = vadd.f32 %v1036, 1.0
  %v1041 = vadd.f32 %v1037, 1.0
  %v1042 = vadd.f32 %v1038, 1.0
  %v1043 = vadd.f32 %v1039, 1.0
  %v1044 = vmul.f32 %v1040, 0.5
  %v1045 = vmul.f32 %v1041, 0.5
  %v1046 = vmul.f32 %v1042, 0.5
  %v1047 = vmul.f32 %v1043, 0.5
  %v1048 = vmul.f32 %v1002, %v1044
  %v1049 = vmul.f32 %v1005, %v1045
  %v1050 = vmul.f32 %v1010, %v1046
  %v1051 = vmul.f32 %v1013, %v1047
  %v1052 = vpack.c.bf16 %v1049, %v1048
  %v1053 = vpack.c.bf16 %v1051, %v1050
  %v1054 = vld [vmem:[%s8] sm:$0xf]
  %v1055 = vld [vmem:[%s8 + $0x4] sm:$0xf]
  %v1056 = vld [vmem:[%s8 + $0x8] sm:$0xf]
  %v1057 = vld [vmem:[%s8 + $0xc] sm:$0xf]
  %v1058 = vld [vmem:[%s8 + $0x10] sm:$0xf]
  %v1059 = vld [vmem:[%s8 + $0x14] sm:$0xf]
  %v1060 = vld [vmem:[%s8 + $0x18] sm:$0xf]
  %v1061 = vld [vmem:[%s8 + $0x1c] sm:$0xf]
  %v1062 = vld [vmem:[%s8 + $0x20] sm:$0xf]
  %v1063 = vld [vmem:[%s8 + $0x24] sm:$0xf]
  %v1064 = vld [vmem:[%s8 + $0x28] sm:$0xf]
  %v1065 = vld [vmem:[%s8 + $0x2c] sm:$0xf]
  %v1066 = vld [vmem:[%s8 + $0x30] sm:$0xf]
  %v1067 = vld [vmem:[%s8 + $0x34] sm:$0xf]
  %v1068 = vld [vmem:[%s8 + $0x38] sm:$0xf]
  %v1069 = vld [vmem:[%s8 + $0x3c] sm:$0xf]
  %v1086 = vunpack.c.l.b16 %v1054
  %v1087 = vunpack.c.l.b16 %v1055
  %v1088 = vunpack.c.l.b16 %v1056
  %v1089 = vunpack.c.l.b16 %v1057
  %v1090 = vunpack.c.l.b16 %v1058
  %v1091 = vunpack.c.l.b16 %v1059
  %v1092 = vunpack.c.l.b16 %v1060
  %v1093 = vunpack.c.l.b16 %v1061
  %v1094 = vunpack.c.l.b16 %v1062
  %v1095 = vunpack.c.l.b16 %v1063
  %v1096 = vunpack.c.l.b16 %v1064
  %v1097 = vunpack.c.l.b16 %v1065
  %v1098 = vunpack.c.l.b16 %v1066
  %v1099 = vunpack.c.l.b16 %v1067
  %v1100 = vunpack.c.l.b16 %v1068
  %v1101 = vunpack.c.l.b16 %v1069
  %v1102 = vpack.c.b16 %v1087, %v1086
  %v1103 = vpack.c.b16 %v1089, %v1088
  %v1104 = vpack.c.b16 %v1091, %v1090
  %v1105 = vpack.c.b16 %v1093, %v1092
  %v1106 = vpack.c.b16 %v1095, %v1094
  %v1107 = vpack.c.b16 %v1097, %v1096
  %v1108 = vpack.c.b16 %v1099, %v1098
  %v1109 = vpack.c.b16 %v1101, %v1100
  %1118 = vmatprep.subr.bf16.mxu0 0
  %1119 = vmatpush1.bf16.msra.mxu0 %v1102
  %1120 = vmatprep.subr.bf16.mxu0 0
  %1121 = vmatpush1.bf16.msra.mxu0 %v1103
  %1122 = vmatprep.subr.bf16.mxu0 0
  %1123 = vmatpush1.bf16.msra.mxu0 %v1104
  %1124 = vmatprep.subr.bf16.mxu0 0
  %1125 = vmatpush1.bf16.msra.mxu0 %v1105
  %1126 = vmatprep.subr.bf16.mxu0 0
  %1127 = vmatpush1.bf16.msra.mxu0 %v1106
  %1128 = vmatprep.subr.bf16.mxu0 0
  %1129 = vmatpush1.bf16.msra.mxu0 %v1107
  %1130 = vmatprep.subr.bf16.mxu0 0
  %1131 = vmatpush1.bf16.msra.mxu0 %v1108
  %1132 = vmatprep.subr.bf16.mxu0 0
  %1133 = vmatpush1.bf16.msra.mxu0 %v1109
  %1134 = vmatprep.subr.bf16.mxu0 0
  %1135 = vmatpush1.bf16.msra.mxu0 0
  %1136 = vmatprep.subr.bf16.mxu0 0
  %1137 = vmatpush1.bf16.msra.mxu0 0
  %1138 = vmatprep.subr.bf16.mxu0 0
  %1139 = vmatpush1.bf16.msra.mxu0 0
  %1140 = vmatprep.subr.bf16.mxu0 0
  %1141 = vmatpush1.bf16.msra.mxu0 0
  %1142 = vmatprep.subr.bf16.mxu0 0
  %1143 = vmatpush1.bf16.msra.mxu0 0
  %1144 = vmatprep.subr.bf16.mxu0 0
  %1145 = vmatpush1.bf16.msra.mxu0 0
  %1146 = vmatprep.subr.bf16.mxu0 0
  %1147 = vmatpush1.bf16.msra.mxu0 0
  %1148 = vmatprep.subr.bf16.mxu0 0
  %1149 = vmatpush1.bf16.msra.mxu0 0
  %1150 = vmatprep.mubr.bf16.mxu0 0
  %1151 = vmatmul.mubr.bf16.gmra.mrb[0].mxu0 %v1052
  %v1152 = vpop.f32.mrb[0].mxu0
  %v1153 = vadd.f32 0.0, %v1152
  %v1154 = vpop.f32.mrb[0].mxu0
  %v1155 = vpop.f32.mrb[0].mxu0
  %v1156 = vadd.f32 0.0, %v1155
  %v1157 = vpop.f32.mrb[0].mxu0
  %1158 = vmatprep.mubr.bf16.mxu0 0
  %1159 = vmatmul.mubr.bf16.gmra.mrb[0].mxu0 %v1053
  %v1160 = vpop.f32.mrb[0].mxu0
  %v1161 = vadd.f32 0.0, %v1160
  %v1162 = vpop.f32.mrb[0].mxu0
  %v1163 = vpop.f32.mrb[0].mxu0
  %v1164 = vadd.f32 0.0, %v1163
  %v1165 = vpop.f32.mrb[0].mxu0
  %1166 = vdwg.mxu0
  %v1167 = vadd.f32 %v822, %v1153
  %v1168 = vadd.f32 %v823, %v1156
  %v1169 = vadd.f32 %v824, %v1161
  %v1170 = vadd.f32 %v825, %v1164
  %v1171 = vld [vmem:[%s9] sm:$0x1]
  %v1173 = vlaneseq
  %v1174 = vshrl.u32 %v1173, 7
  %v1175 = vsub.s32 0, %v1174
  %v1176 = vrot.slane %v1171, %v1175
  %v1178 = vadd.f32 %v1167, %v1176
  %v1179 = vadd.f32 %v1168, %v1176
  %v1180 = vadd.f32 %v1169, %v1176
  %v1181 = vadd.f32 %v1170, %v1176
  %v1182 = vpack.c.bf16 %v1179, %v1178
  %v1183 = vpack.c.bf16 %v1181, %v1180
  %v1184 = vld [vmem:[%s10] sm:$0xf]
  %v1185 = vld [vmem:[%s10 + $0x4] sm:$0xf]
  %v1186 = vld [vmem:[%s10 + $0x8] sm:$0xf]
  %v1187 = vld [vmem:[%s10 + $0xc] sm:$0xf]
  %v1188 = vld [vmem:[%s10 + $0x10] sm:$0xf]
  %v1189 = vld [vmem:[%s10 + $0x14] sm:$0xf]
  %v1190 = vld [vmem:[%s10 + $0x18] sm:$0xf]
  %v1191 = vld [vmem:[%s10 + $0x1c] sm:$0xf]
  %v1192 = vld [vmem:[%s10 + $0x20] sm:$0xf]
  %v1193 = vld [vmem:[%s10 + $0x24] sm:$0xf]
  %v1194 = vld [vmem:[%s10 + $0x28] sm:$0xf]
  %v1195 = vld [vmem:[%s10 + $0x2c] sm:$0xf]
  %v1196 = vld [vmem:[%s10 + $0x30] sm:$0xf]
  %v1197 = vld [vmem:[%s10 + $0x34] sm:$0xf]
  %v1198 = vld [vmem:[%s10 + $0x38] sm:$0xf]
  %v1199 = vld [vmem:[%s10 + $0x3c] sm:$0xf]
  %v1200 = vld [vmem:[%s11] sm:$0x1]
  %v1202 = vlaneseq
  %v1203 = vshrl.u32 %v1202, 7
  %v1204 = vsub.s32 0, %v1203
  %v1205 = vrot.slane %v1200, %v1204
  %v1223 = vunpack.c.l.b16 %v1184
  %v1224 = vunpack.c.l.b16 %v1185
  %v1225 = vunpack.c.l.b16 %v1186
  %v1226 = vunpack.c.l.b16 %v1187
  %v1227 = vunpack.c.l.b16 %v1188
  %v1228 = vunpack.c.l.b16 %v1189
  %v1229 = vunpack.c.l.b16 %v1190
  %v1230 = vunpack.c.l.b16 %v1191
  %v1231 = vunpack.c.l.b16 %v1192
  %v1232 = vunpack.c.l.b16 %v1193
  %v1233 = vunpack.c.l.b16 %v1194
  %v1234 = vunpack.c.l.b16 %v1195
  %v1235 = vunpack.c.l.b16 %v1196
  %v1236 = vunpack.c.l.b16 %v1197
  %v1237 = vunpack.c.l.b16 %v1198
  %v1238 = vunpack.c.l.b16 %v1199
  %v1239 = vpack.c.b16 %v1224, %v1223
  %v1240 = vpack.c.b16 %v1226, %v1225
  %v1241 = vpack.c.b16 %v1228, %v1227
  %v1242 = vpack.c.b16 %v1230, %v1229
  %v1243 = vpack.c.b16 %v1232, %v1231
  %v1244 = vpack.c.b16 %v1234, %v1233
  %v1245 = vpack.c.b16 %v1236, %v1235
  %v1246 = vpack.c.b16 %v1238, %v1237
  %1255 = vmatprep.subr.bf16.mxu0 0
  %1256 = vmatpush1.bf16.msra.mxu0 %v1239
  %1257 = vmatprep.subr.bf16.mxu0 0
  %1258 = vmatpush1.bf16.msra.mxu0 %v1240
  %1259 = vmatprep.subr.bf16.mxu0 0
  %1260 = vmatpush1.bf16.msra.mxu0 %v1241
  %1261 = vmatprep.subr.bf16.mxu0 0
  %1262 = vmatpush1.bf16.msra.mxu0 %v1242
  %1263 = vmatprep.subr.bf16.mxu0 0
  %1264 = vmatpush1.bf16.msra.mxu0 %v1243
  %1265 = vmatprep.subr.bf16.mxu0 0
  %1266 = vmatpush1.bf16.msra.mxu0 %v1244
  %1267 = vmatprep.subr.bf16.mxu0 0
  %1268 = vmatpush1.bf16.msra.mxu0 %v1245
  %1269 = vmatprep.subr.bf16.mxu0 0
  %1270 = vmatpush1.bf16.msra.mxu0 %v1246
  %1271 = vmatprep.subr.bf16.mxu0 0
  %1272 = vmatpush1.bf16.msra.mxu0 0
  %1273 = vmatprep.subr.bf16.mxu0 0
  %1274 = vmatpush1.bf16.msra.mxu0 0
  %1275 = vmatprep.subr.bf16.mxu0 0
  %1276 = vmatpush1.bf16.msra.mxu0 0
  %1277 = vmatprep.subr.bf16.mxu0 0
  %1278 = vmatpush1.bf16.msra.mxu0 0
  %1279 = vmatprep.subr.bf16.mxu0 0
  %1280 = vmatpush1.bf16.msra.mxu0 0
  %1281 = vmatprep.subr.bf16.mxu0 0
  %1282 = vmatpush1.bf16.msra.mxu0 0
  %1283 = vmatprep.subr.bf16.mxu0 0
  %1284 = vmatpush1.bf16.msra.mxu0 0
  %1285 = vmatprep.subr.bf16.mxu0 0
  %1286 = vmatpush1.bf16.msra.mxu0 0
  %1287 = vmatprep.mubr.bf16.mxu0 0
  %1288 = vmatmul.mubr.bf16.gmra.mrb[0].mxu0 %v1182
  %v1289 = vpop.f32.mrb[0].mxu0
  %v1290 = vadd.f32 %v1205, %v1289
  %v1291 = vpop.f32.mrb[0].mxu0
  %v1292 = vpop.f32.mrb[0].mxu0
  %v1293 = vadd.f32 %v1205, %v1292
  %v1294 = vpop.f32.mrb[0].mxu0
  %1295 = vmatprep.mubr.bf16.mxu0 0
  %1296 = vmatmul.mubr.bf16.gmra.mrb[0].mxu0 %v1183
  %v1297 = vpop.f32.mrb[0].mxu0
  %v1298 = vadd.f32 %v1205, %v1297
  %v1299 = vpop.f32.mrb[0].mxu0
  %v1300 = vpop.f32.mrb[0].mxu0
  %v1301 = vadd.f32 %v1205, %v1300
  %v1302 = vpop.f32.mrb[0].mxu0
  %1303 = vdwg.mxu0
  %1304 = vst [vmem:[%s12] sm:$0xff] %v1290
  %1305 = vst [vmem:[%s12 + $0x8] sm:$0xff] %v1293
  %1306 = vst [vmem:[%s12 + $0x10] sm:$0xff] %v1298
  %1307 = vst [vmem:[%s12 + $0x18] sm:$0xff] %v1301
  // Predicated region
  $region50: #{trans_weather_yolov6.2} parent=0 // pred_check
    _
  $region51: #{trans_weather_yolov6.2} parent=0 // pred_check_branch
    %1309 = sbr.rel (0) target = $region53
  $region52: #{trans_weather_yolov6.2} parent=0 // pred_region
    _
  $region53: #{trans_weather_yolov6.2} parent=0 // pred_fallthru
    _
  // Predicated region
  $region54: #{trans_weather_yolov6.2} parent=0 // pred_check
    _
  $region55: #{trans_weather_yolov6.2} parent=0 // pred_check_branch
    %1311 = sbr.rel (0) target = $region57
  $region56: #{trans_weather_yolov6.2} parent=0 // pred_region
    _
  $region57: #{trans_weather_yolov6.2} parent=0 // pred_fallthru
    _

// kernel: trans_weather_yolov6.3
$region0: #{trans_weather_yolov6.3}
  #allocation0 [shape = 'u32[]', space=smem, size = 0x4, offset = 0x4, fixed_abs, tag = 'smem constant byte address 0x4 - core index']
  #allocation1 [shape = 'u32[144,128]{1,0:T(1,128)}', space=vmem, size = 0x12000, scoped, tag = 'internal scratch']
  #allocation2 [shape = 'f32[10,10,16]{2,1,0:T(8,128)}', space=vmem, size = 0x14000, scoped, tag = 'scratch operand']
  %s0 = inlined_call_operand.vmem [shape: f32[2,9,9,16], index: 0, kind: input, shape index: {}]
  %s1 = inlined_call_operand.vmem [shape: bf16[64,16], index: 1, kind: input, shape index: {}]
  %s2 = inlined_call_operand.vmem [shape: f32[1,16], index: 2, kind: input, shape index: {}]
  %s3 = inlined_call_operand.vmem [shape: bf16[144,32], index: 3, kind: input, shape index: {}]
  %s4 = inlined_call_operand.vmem [shape: f32[1,32], index: 4, kind: input, shape index: {}]
  %s5 = inlined_call_operand.vmem [shape: bf16[32,128], index: 5, kind: input, shape index: {}]
  %s6 = inlined_call_operand.vmem [shape: f32[1,128], index: 6, kind: input, shape index: {}]
  %s7 = inlined_call_operand.vmem [shape: f32[2,4,8,128], index: 7, kind: output, shape index: {}]
  %s8 = sld [smem:[#allocation0]]
  $region61: #{trans_weather_yolov6.3} parent=0
    _
  %s10 = ssub.s32 1, %s8
  %s11 = scalar_select 0, %s10, %s8
  loop: start=0, step=1, limit=4
  $region2: #{trans_weather_yolov6.3} parent=0 // loop_pre_header
    _
  $region3: #{trans_weather_yolov6.3} parent=0 // loop_header
    %s13 = sphi 0, %s17
    %p14 = scmp.ge.s32.totalorder %s13, 4
    %s23 = sphi 0, %s25
    %s26 = sphi 0, %s23
    %s27 = sphi 0, %s26
    %s43 = sphi 0, %s27
    %s47 = sphi 0, %s47
    %s49 = sphi 0, %s47
    %s50 = sphi 0, %s49
    %s64 = sphi 0, %s50
    %s68 = sphi 0, %s68
    %s70 = sphi 0, %s68
    %s71 = sphi 0, %s70
    %s85 = sphi 0, %s71
    %s89 = sphi 0, %s89
    %s91 = sphi 0, %s89
    %s92 = sphi 0, %s91
    %s106 = sphi 0, %s92
    %s110 = sphi 0, %s110
    %s112 = sphi 0, %s110
    %s113 = sphi 0, %s112
    %s127 = sphi 0, %s113
    %s131 = sphi 0, %s131
    %s133 = sphi 0, %s131
    %s134 = sphi 0, %s133
    %s148 = sphi 0, %s134
    %s152 = sphi 0, %s152
    %s154 = sphi 0, %s152
    %s155 = sphi 0, %s154
    %s169 = sphi 0, %s155
    %s175 = sphi 0, %s177
    %s178 = sphi 0, %s175
    %s179 = sphi 0, %s178
    %s195 = sphi 0, %s179
  $region4: #{trans_weather_yolov6.3} parent=0 // loop_header_branch
    %16 = sbr.rel (%p14) target = $region8
  $region5: #{trans_weather_yolov6.3} parent=0 // loop_body
    %s18 = ssub.s32 %s13, 1
    %s19 = ssub.s32 %s13, 2
    %s20 = sadd.s32 %s13, 1
    %s21 = ssub.s32 %s13, %s20
    %p22 = scmp.eq.s32.totalorder %s21, 0
    %s24 = sadd.s32 %s23, 1
    %s25 = scalar_select %p22, %s23, %s24
    %p28 = pneg %p22
    %p29 = scmp.eq.s32.totalorder %s13, 1
    %p30 = por %p28, %p29
    %p31 = scmp.ne.s32.totalorder %s23, %s26
    %p32 = scmp.eq.s32.totalorder %s13, 0
    %p33 = por %p31, %p32
    %p34 = scmp.ne.s32.totalorder %s23, %s26
    %p35 = scmp.eq.s32.totalorder %s18, 1
    %p36 = por %p34, %p35
    %p37 = scmp.ne.s32.totalorder %s26, %s27
    %p38 = scmp.eq.s32.totalorder %s18, 0
    %p39 = por %p37, %p38
    %p40 = scmp.ne.s32.totalorder %s26, %s27
    %p41 = scmp.eq.s32.totalorder %s19, 1
    %p42 = por %p40, %p41
    %p44 = scmp.ne.s32.totalorder %s27, %s43
    %p45 = scmp.eq.s32.totalorder %s19, 0
    %p46 = por %p44, %p45
    %s48 = sadd.s32 %s47, 1
    %p51 = scmp.eq.s32.totalorder %s13, 1
    %p52 = scmp.ne.s32.totalorder %s47, %s49
    %p53 = scmp.eq.s32.totalorder %s13, 0
    %p54 = por %p52, %p53
    %p55 = scmp.ne.s32.totalorder %s47, %s49
    %p56 = scmp.eq.s32.totalorder %s18, 1
    %p57 = por %p55, %p56
    %p58 = scmp.ne.s32.totalorder %s49, %s50
    %p59 = scmp.eq.s32.totalorder %s18, 0
    %p60 = por %p58, %p59
    %p61 = scmp.ne.s32.totalorder %s49, %s50
    %p62 = scmp.eq.s32.totalorder %s19, 1
    %p63 = por %p61, %p62
    %p65 = scmp.ne.s32.totalorder %s50, %s64
    %p66 = scmp.eq.s32.totalorder %s19, 0
    %p67 = por %p65, %p66
    %s69 = sadd.s32 %s68, 1
    %p72 = scmp.eq.s32.totalorder %s13, 1
    %p73 = scmp.ne.s32.totalorder %s68, %s70
    %p74 = scmp.eq.s32.totalorder %s13, 0
    %p75 = por %p73, %p74
    %p76 = scmp.ne.s32.totalorder %s68, %s70
    %p77 = scmp.eq.s32.totalorder %s18, 1
    %p78 = por %p76, %p77
    %p79 = scmp.ne.s32.totalorder %s70, %s71
    %p80 = scmp.eq.s32.totalorder %s18, 0
    %p81 = por %p79, %p80
    %p82 = scmp.ne.s32.totalorder %s70, %s71
    %p83 = scmp.eq.s32.totalorder %s19, 1
    %p84 = por %p82, %p83
    %p86 = scmp.ne.s32.totalorder %s71, %s85
    %p87 = scmp.eq.s32.totalorder %s19, 0
    %p88 = por %p86, %p87
    %s90 = sadd.s32 %s89, 1
    %p93 = scmp.eq.s32.totalorder %s13, 1
    %p94 = scmp.ne.s32.totalorder %s89, %s91
    %p95 = scmp.eq.s32.totalorder %s13, 0
    %p96 = por %p94, %p95
    %p97 = scmp.ne.s32.totalorder %s89, %s91
    %p98 = scmp.eq.s32.totalorder %s18, 1
    %p99 = por %p97, %p98
    %p100 = scmp.ne.s32.totalorder %s91, %s92
    %p101 = scmp.eq.s32.totalorder %s18, 0
    %p102 = por %p100, %p101
    %p103 = scmp.ne.s32.totalorder %s91, %s92
    %p104 = scmp.eq.s32.totalorder %s19, 1
    %p105 = por %p103, %p104
    %p107 = scmp.ne.s32.totalorder %s92, %s106
    %p108 = scmp.eq.s32.totalorder %s19, 0
    %p109 = por %p107, %p108
    %s111 = sadd.s32 %s110, 1
    %p114 = scmp.eq.s32.totalorder %s13, 1
    %p115 = scmp.ne.s32.totalorder %s110, %s112
    %p116 = scmp.eq.s32.totalorder %s13, 0
    %p117 = por %p115, %p116
    %p118 = scmp.ne.s32.totalorder %s110, %s112
    %p119 = scmp.eq.s32.totalorder %s18, 1
    %p120 = por %p118, %p119
    %p121 = scmp.ne.s32.totalorder %s112, %s113
    %p122 = scmp.eq.s32.totalorder %s18, 0
    %p123 = por %p121, %p122
    %p124 = scmp.ne.s32.totalorder %s112, %s113
    %p125 = scmp.eq.s32.totalorder %s19, 1
    %p126 = por %p124, %p125
    %p128 = scmp.ne.s32.totalorder %s113, %s127
    %p129 = scmp.eq.s32.totalorder %s19, 0
    %p130 = por %p128, %p129
    %s132 = sadd.s32 %s131, 1
    %p135 = scmp.eq.s32.totalorder %s13, 1
    %p136 = scmp.ne.s32.totalorder %s131, %s133
    %p137 = scmp.eq.s32.totalorder %s13, 0
    %p138 = por %p136, %p137
    %p139 = scmp.ne.s32.totalorder %s131, %s133
    %p140 = scmp.eq.s32.totalorder %s18, 1
    %p141 = por %p139, %p140
    %p142 = scmp.ne.s32.totalorder %s133, %s134
    %p143 = scmp.eq.s32.totalorder %s18, 0
    %p144 = por %p142, %p143
    %p145 = scmp.ne.s32.totalorder %s133, %s134
    %p146 = scmp.eq.s32.totalorder %s19, 1
    %p147 = por %p145, %p146
    %p149 = scmp.ne.s32.totalorder %s134, %s148
    %p150 = scmp.eq.s32.totalorder %s19, 0
    %p151 = por %p149, %p150
    %s153 = sadd.s32 %s152, 1
    %p156 = scmp.eq.s32.totalorder %s13, 1
    %p157 = scmp.ne.s32.totalorder %s152, %s154
    %p158 = scmp.eq.s32.totalorder %s13, 0
    %p159 = por %p157, %p158
    %p160 = scmp.ne.s32.totalorder %s152, %s154
    %p161 = scmp.eq.s32.totalorder %s18, 1
    %p162 = por %p160, %p161
    %p163 = scmp.ne.s32.totalorder %s154, %s155
    %p164 = scmp.eq.s32.totalorder %s18, 0
    %p165 = por %p163, %p164
    %p166 = scmp.ne.s32.totalorder %s154, %s155
    %p167 = scmp.eq.s32.totalorder %s19, 1
    %p168 = por %p166, %p167
    %p170 = scmp.ne.s32.totalorder %s155, %s169
    %p171 = scmp.eq.s32.totalorder %s19, 0
    %p172 = por %p170, %p171
    %s173 = ssub.s32 %s13, %s20
    %p174 = scmp.eq.s32.totalorder %s173, 0
    %s176 = sadd.s32 %s175, 1
    %s177 = scalar_select %p174, %s175, %s176
    %p180 = pneg %p174
    %p181 = scmp.eq.s32.totalorder %s13, 1
    %p182 = por %p180, %p181
    %p183 = scmp.ne.s32.totalorder %s175, %s178
    %p184 = scmp.eq.s32.totalorder %s13, 0
    %p185 = por %p183, %p184
    %p186 = scmp.ne.s32.totalorder %s175, %s178
    %p187 = scmp.eq.s32.totalorder %s18, 1
    %p188 = por %p186, %p187
    %p189 = scmp.ne.s32.totalorder %s178, %s179
    %p190 = scmp.eq.s32.totalorder %s18, 0
    %p191 = por %p189, %p190
    %p192 = scmp.ne.s32.totalorder %s178, %s179
    %p193 = scmp.eq.s32.totalorder %s19, 1
    %p194 = por %p192, %p193
    %p196 = scmp.ne.s32.totalorder %s179, %s195
    %p197 = scmp.eq.s32.totalorder %s19, 0
    %p198 = por %p196, %p197
    %p199 = scmp.le.s32.totalorder 1, %s13
    %p200 = scmp.lt.s32.totalorder %s13, 3
    %p201 = pnand %p199, %p200
    %p202 = pneg %p201
    // Predicated region
    $region9: #{trans_weather_yolov6.3} parent=5 // pred_check
      _
    $region10: #{trans_weather_yolov6.3} parent=5 // pred_check_branch
      %204 = sbr.rel (%p201) target = $region12
    $region11: #{trans_weather_yolov6.3} parent=5 // pred_region
      %s205 = ssub.s32 %s13, 1
      // Predicated region
      $region13: #{trans_weather_yolov6.3} parent=11 // pred_check
        %p206 = pneg %p60
      $region14: #{trans_weather_yolov6.3} parent=11 // pred_check_branch
        %208 = sbr.rel (%p206) target = $region16
      $region15: #{trans_weather_yolov6.3} parent=11 // pred_region
        _
      $region16: #{trans_weather_yolov6.3} parent=11 // pred_fallthru
        _
      // Predicated region
      $region17: #{trans_weather_yolov6.3} parent=11 // pred_check
        %p209 = pneg %p81
      $region18: #{trans_weather_yolov6.3} parent=11 // pred_check_branch
        %211 = sbr.rel (%p209) target = $region20
      $region19: #{trans_weather_yolov6.3} parent=11 // pred_region
        _
      $region20: #{trans_weather_yolov6.3} parent=11 // pred_fallthru
        _
      // Predicated region
      $region21: #{trans_weather_yolov6.3} parent=11 // pred_check
        %p212 = pneg %p102
      $region22: #{trans_weather_yolov6.3} parent=11 // pred_check_branch
        %214 = sbr.rel (%p212) target = $region24
      $region23: #{trans_weather_yolov6.3} parent=11 // pred_region
        _
      $region24: #{trans_weather_yolov6.3} parent=11 // pred_fallthru
        _
      // Predicated region
      $region25: #{trans_weather_yolov6.3} parent=11 // pred_check
        %p215 = pneg %p123
      $region26: #{trans_weather_yolov6.3} parent=11 // pred_check_branch
        %217 = sbr.rel (%p215) target = $region28
      $region27: #{trans_weather_yolov6.3} parent=11 // pred_region
        _
      $region28: #{trans_weather_yolov6.3} parent=11 // pred_fallthru
        _
      // Predicated region
      $region29: #{trans_weather_yolov6.3} parent=11 // pred_check
        %p218 = pneg %p144
      $region30: #{trans_weather_yolov6.3} parent=11 // pred_check_branch
        %220 = sbr.rel (%p218) target = $region32
      $region31: #{trans_weather_yolov6.3} parent=11 // pred_region
        _
      $region32: #{trans_weather_yolov6.3} parent=11 // pred_fallthru
        _
      // Predicated region
      $region33: #{trans_weather_yolov6.3} parent=11 // pred_check
        %p221 = pneg %p165
      $region34: #{trans_weather_yolov6.3} parent=11 // pred_check_branch
        %223 = sbr.rel (%p221) target = $region36
      $region35: #{trans_weather_yolov6.3} parent=11 // pred_region
        _
      $region36: #{trans_weather_yolov6.3} parent=11 // pred_fallthru
        _
    $region12: #{trans_weather_yolov6.3} parent=5 // pred_fallthru
      _
    %p224 = scmp.lt.s32.totalorder %s13, 2
    // Predicated region
    $region37: #{trans_weather_yolov6.3} parent=5 // pred_check
      %p225 = pneg %p224
    $region38: #{trans_weather_yolov6.3} parent=5 // pred_check_branch
      %227 = sbr.rel (%p225) target = $region40
    $region39: #{trans_weather_yolov6.3} parent=5 // pred_region
      // Predicated region
      $region41: #{trans_weather_yolov6.3} parent=39 // pred_check
        %p228 = pneg %p33
      $region42: #{trans_weather_yolov6.3} parent=39 // pred_check_branch
        %230 = sbr.rel (%p228) target = $region44
      $region43: #{trans_weather_yolov6.3} parent=39 // pred_region
        %p231 = scmp.lt.s32.totalorder %s13, 1
        %s232 = scalar_select %p231, %s13, 1
        %s233 = smul.addr %s232, 18
        %s234 = smul.addr %s233, 8
        %s235 = scalar_lea.vmem %s0, %s234
      $region44: #{trans_weather_yolov6.3} parent=39 // pred_fallthru
        _
    $region40: #{trans_weather_yolov6.3} parent=5 // pred_fallthru
      _
    %p236 = scmp.le.s32.totalorder 1, %s13
    %p237 = scmp.lt.s32.totalorder %s13, 3
    %p238 = pnand %p236, %p237
    %p239 = pneg %p238
    // Predicated region
    $region45: #{trans_weather_yolov6.3} parent=5 // pred_check
      _
    $region46: #{trans_weather_yolov6.3} parent=5 // pred_check_branch
      %241 = sbr.rel (%p238) target = $region48
    $region47: #{trans_weather_yolov6.3} parent=5 // pred_region
      %s242 = ssub.s32 %s13, 1
      %p243 = scmp.lt.s32.totalorder %s18, 1
      %s244 = scalar_select %p243, %s18, 1
      %s245 = smul.addr %s244, 18
      %s246 = smul.addr %s245, 8
      %s247 = scalar_lea.vmem %s0, %s246
      %p248 = pneg %p39
      %p249 = pneg %p36
      %p250 = pneg %p60
      %p251 = pneg %p57
      %p252 = pneg %p81
      %p253 = pneg %p78
      %p254 = pneg %p102
      %p255 = pneg %p99
      %p256 = pneg %p123
      %p257 = pneg %p120
      %p258 = pneg %p144
      %p259 = pneg %p141
      %p260 = pneg %p165
      %p261 = pneg %p162
      %p262 = pneg %p191
      %p263 = pneg %p188
      %p264 = scmp.lt.s32.totalorder %s18, 1
      %s265 = scalar_select %p264, %s18, 1
      %s266 = smul.addr %s265, 4
      %s267 = smul.addr %s266, 8
      %s268 = scalar_lea.vmem %s7, %s267
      %p269 = scmp.lt.s32.totalorder %s18, 1
      %s270 = scalar_select %p269, %s18, 1
      %s271 = smul.addr %s270, 18
      %s272 = smul.addr %s271, 8
      %s273 = scalar_lea.vmem %s0, %s272
      %p274 = scmp.lt.s32.totalorder %s18, 1
      %s275 = scalar_select %p274, %s18, 1
      %s276 = smul.addr %s275, 4
      %s277 = smul.addr %s276, 8
      %s278 = scalar_lea.vmem %s7, %s277
      %v280 = vld [vmem:[%s273] sm:$0xff]
      %v281 = vld [vmem:[%s273 + $0x8] sm:$0x1]
      %v282 = vld [vmem:[%s273 + $0x10] sm:$0xff]
      %v283 = vld [vmem:[%s273 + $0x18] sm:$0x1]
      %v284 = vld [vmem:[%s273 + $0x20] sm:$0xff]
      %v285 = vld [vmem:[%s273 + $0x28] sm:$0x1]
      %v286 = vld [vmem:[%s273 + $0x30] sm:$0xff]
      %v287 = vld [vmem:[%s273 + $0x38] sm:$0x1]
      %v288 = vld [vmem:[%s273 + $0x40] sm:$0xff]
      %v289 = vld [vmem:[%s273 + $0x48] sm:$0x1]
      %v290 = vld [vmem:[%s273 + $0x50] sm:$0xff]
      %v291 = vld [vmem:[%s273 + $0x58] sm:$0x1]
      %v292 = vld [vmem:[%s273 + $0x60] sm:$0xff]
      %v293 = vld [vmem:[%s273 + $0x68] sm:$0x1]
      %v294 = vld [vmem:[%s273 + $0x70] sm:$0xff]
      %v295 = vld [vmem:[%s273 + $0x78] sm:$0x1]
      %v296 = vld [vmem:[%s273 + $0x80] sm:$0xff]
      %v297 = vld [vmem:[%s273 + $0x88] sm:$0x1]
      %vm314 = vcmask 1046528
      %v315 = vrot.slane %v280, 1
      %v316 = vrot.slane %v281, 1
      %v317 = vsel %vm314, %v315, %v316
      %v318 = vrot.slane %v282, 1
      %v319 = vrot.slane %v283, 1
      %v320 = vsel %vm314, %v318, %v319
      %v321 = vrot.slane %v284, 1
      %v322 = vrot.slane %v285, 1
      %v323 = vsel %vm314, %v321, %v322
      %v324 = vrot.slane %v286, 1
      %v325 = vrot.slane %v287, 1
      %v326 = vsel %vm314, %v324, %v325
      %v327 = vrot.slane %v288, 1
      %v328 = vrot.slane %v289, 1
      %v329 = vsel %vm314, %v327, %v328
      %v330 = vrot.slane %v290, 1
      %v331 = vrot.slane %v291, 1
      %v332 = vsel %vm314, %v330, %v331
      %v333 = vrot.slane %v292, 1
      %v334 = vrot.slane %v293, 1
      %v335 = vsel %vm314, %v333, %v334
      %v336 = vrot.slane %v294, 1
      %v337 = vrot.slane %v295, 1
      %v338 = vsel %vm314, %v336, %v337
      %339 = vrot.lane.b32.xlu0 %v317, 16
      %v340 = vpop.permute.xlu0 %339
      %341 = vrot.lane.b32.xlu0 %v320, 16
      %v342 = vpop.permute.xlu0 %341
      %343 = vrot.lane.b32.xlu0 %v323, 16
      %v344 = vpop.permute.xlu0 %343
      %345 = vrot.lane.b32.xlu0 %v326, 16
      %v346 = vpop.permute.xlu0 %345
      %347 = vrot.lane.b32.xlu0 %v329, 16
      %v348 = vpop.permute.xlu0 %347
      %349 = vrot.lane.b32.xlu0 %v332, 16
      %v350 = vpop.permute.xlu0 %349
      %351 = vrot.lane.b32.xlu0 %v335, 16
      %v352 = vpop.permute.xlu0 %351
      %353 = vrot.lane.b32.xlu0 %v338, 16
      %v354 = vpop.permute.xlu0 %353
      %364 = vrot.lane.b32.xlu0 %v282, 32
      %v365 = vpop.permute.xlu0 %364
      %366 = vrot.lane.b32.xlu0 %v284, 32
      %v367 = vpop.permute.xlu0 %366
      %368 = vrot.lane.b32.xlu0 %v286, 32
      %v369 = vpop.permute.xlu0 %368
      %370 = vrot.lane.b32.xlu0 %v288, 32
      %v371 = vpop.permute.xlu0 %370
      %372 = vrot.lane.b32.xlu0 %v290, 32
      %v373 = vpop.permute.xlu0 %372
      %374 = vrot.lane.b32.xlu0 %v292, 32
      %v375 = vpop.permute.xlu0 %374
      %376 = vrot.lane.b32.xlu0 %v294, 32
      %v377 = vpop.permute.xlu0 %376
      %378 = vrot.lane.b32.xlu0 %v296, 32
      %v379 = vpop.permute.xlu0 %378
      %v389 = vrot.slane %v296, 1
      %v390 = vrot.slane %v297, 1
      %v391 = vsel %vm314, %v389, %v390
      %392 = vrot.lane.b32.xlu0 %v320, 48
      %v393 = vpop.permute.xlu0 %392
      %394 = vrot.lane.b32.xlu0 %v323, 48
      %v395 = vpop.permute.xlu0 %394
      %396 = vrot.lane.b32.xlu0 %v326, 48
      %v397 = vpop.permute.xlu0 %396
      %398 = vrot.lane.b32.xlu0 %v329, 48
      %v399 = vpop.permute.xlu0 %398
      %400 = vrot.lane.b32.xlu0 %v332, 48
      %v401 = vpop.permute.xlu0 %400
      %402 = vrot.lane.b32.xlu0 %v335, 48
      %v403 = vpop.permute.xlu0 %402
      %404 = vrot.lane.b32.xlu0 %v338, 48
      %v405 = vpop.permute.xlu0 %404
      %406 = vrot.lane.b32.xlu0 %v391, 48
      %v407 = vpop.permute.xlu0 %406
      %vm416 = vcmask 130048
      %v417 = vsel %vm416, %v280, %v340
      %v418 = vsel %vm416, %v282, %v342
      %v419 = vsel %vm416, %v284, %v344
      %v420 = vsel %vm416, %v286, %v346
      %v421 = vsel %vm416, %v288, %v348
      %v422 = vsel %vm416, %v290, %v350
      %v423 = vsel %vm416, %v292, %v352
      %v424 = vsel %vm416, %v294, %v354
      %vm425 = vcmask 261120
      %v426 = vsel %vm425, %v417, %v365
      %v427 = vsel %vm425, %v418, %v367
      %v428 = vsel %vm425, %v419, %v369
      %v429 = vsel %vm425, %v420, %v371
      %v430 = vsel %vm425, %v421, %v373
      %v431 = vsel %vm425, %v422, %v375
      %v432 = vsel %vm425, %v423, %v377
      %v433 = vsel %vm425, %v424, %v379
      %vm434 = vcmask 392192
      %v435 = vsel %vm434, %v426, %v393
      %v436 = vsel %vm434, %v427, %v395
      %v437 = vsel %vm434, %v428, %v397
      %v438 = vsel %vm434, %v429, %v399
      %v439 = vsel %vm434, %v430, %v401
      %v440 = vsel %vm434, %v431, %v403
      %v441 = vsel %vm434, %v432, %v405
      %v442 = vsel %vm434, %v433, %v407
      %v443 = vpack.c.bf16 %v436, %v435
      %v444 = vpack.c.bf16 %v438, %v437
      %v445 = vpack.c.bf16 %v440, %v439
      %v446 = vpack.c.bf16 %v442, %v441
      %v447 = vld [vmem:[%s1] sm:$0xf]
      %v448 = vld [vmem:[%s1 + $0x4] sm:$0xf]
      %v449 = vld [vmem:[%s1 + $0x8] sm:$0xf]
      %v450 = vld [vmem:[%s1 + $0xc] sm:$0xf]
      %v451 = vld [vmem:[%s1 + $0x10] sm:$0xf]
      %v452 = vld [vmem:[%s1 + $0x14] sm:$0xf]
      %v453 = vld [vmem:[%s1 + $0x18] sm:$0xf]
      %v454 = vld [vmem:[%s1 + $0x1c] sm:$0xf]
      %v455 = vld [vmem:[%s2] sm:$0x1]
      %v457 = vlaneseq
      %v458 = vshrl.u32 %v457, 7
      %v459 = vsub.s32 0, %v458
      %v460 = vrot.slane %v455, %v459
      %v470 = vunpack.c.l.b16 %v447
      %v471 = vunpack.c.l.b16 %v448
      %v472 = vunpack.c.l.b16 %v449
      %v473 = vunpack.c.l.b16 %v450
      %v474 = vunpack.c.l.b16 %v451
      %v475 = vunpack.c.l.b16 %v452
      %v476 = vunpack.c.l.b16 %v453
      %v477 = vunpack.c.l.b16 %v454
      %v478 = vpack.c.b16 %v471, %v470
      %v479 = vpack.c.b16 %v473, %v472
      %v480 = vpack.c.b16 %v475, %v474
      %v481 = vpack.c.b16 %v477, %v476
      %vm486 = vcmask 523264
      %v488 = vsel %vm486, %v443, 0
      %v491 = vsel %vm486, %v444, 0
      %v494 = vsel %vm486, %v445, 0
      %v497 = vsel %vm486, %v446, 0
      %499 = vmatprep.subr.bf16.mxu0 0
      %500 = vmatpush1.bf16.msra.mxu0 %v478
      %501 = vmatprep.subr.bf16.mxu0 0
      %502 = vmatpush1.bf16.msra.mxu0 %v479
      %503 = vmatprep.subr.bf16.mxu0 0
      %504 = vmatpush1.bf16.msra.mxu0 %v480
      %505 = vmatprep.subr.bf16.mxu0 0
      %506 = vmatpush1.bf16.msra.mxu0 %v481
      %507 = vmatprep.subr.bf16.mxu0 0
      %508 = vmatpush1.bf16.msra.mxu0 0
      %509 = vmatprep.subr.bf16.mxu0 0
      %510 = vmatpush1.bf16.msra.mxu0 0
      %511 = vmatprep.subr.bf16.mxu0 0
      %512 = vmatpush1.bf16.msra.mxu0 0
      %513 = vmatprep.subr.bf16.mxu0 0
      %514 = vmatpush1.bf16.msra.mxu0 0
      %515 = vmatprep.subr.bf16.mxu0 0
      %516 = vmatpush1.bf16.msra.mxu0 0
      %517 = vmatprep.subr.bf16.mxu0 0
      %518 = vmatpush1.bf16.msra.mxu0 0
      %519 = vmatprep.subr.bf16.mxu0 0
      %520 = vmatpush1.bf16.msra.mxu0 0
      %521 = vmatprep.subr.bf16.mxu0 0
      %522 = vmatpush1.bf16.msra.mxu0 0
      %523 = vmatprep.subr.bf16.mxu0 0
      %524 = vmatpush1.bf16.msra.mxu0 0
      %525 = vmatprep.subr.bf16.mxu0 0
      %526 = vmatpush1.bf16.msra.mxu0 0
      %527 = vmatprep.subr.bf16.mxu0 0
      %528 = vmatpush1.bf16.msra.mxu0 0
      %529 = vmatprep.subr.bf16.mxu0 0
      %530 = vmatpush1.bf16.msra.mxu0 0
      %531 = vmatprep.mubr.bf16.mxu0 0
      %532 = vmatmul.mubr.bf16.gmra.mrb[0].mxu0 %v488
      %v533 = vpop.f32.mrb[0].mxu0
      %v534 = vadd.f32 %v460, %v533
      %v535 = vpop.f32.mrb[0].mxu0
      %v536 = vpop.f32.mrb[0].mxu0
      %v537 = vadd.f32 %v460, %v536
      %v538 = vpop.f32.mrb[0].mxu0
      %539 = vmatprep.mubr.bf16.mxu0 0
      %540 = vmatmul.mubr.bf16.gmra.mrb[0].mxu0 %v491
      %v541 = vpop.f32.mrb[0].mxu0
      %v542 = vadd.f32 %v460, %v541
      %v543 = vpop.f32.mrb[0].mxu0
      %v544 = vpop.f32.mrb[0].mxu0
      %v545 = vadd.f32 %v460, %v544
      %v546 = vpop.f32.mrb[0].mxu0
      %547 = vmatprep.mubr.bf16.mxu0 0
      %548 = vmatmul.mubr.bf16.gmra.mrb[0].mxu0 %v494
      %v549 = vpop.f32.mrb[0].mxu0
      %v550 = vadd.f32 %v460, %v549
      %v551 = vpop.f32.mrb[0].mxu0
      %v552 = vpop.f32.mrb[0].mxu0
      %v553 = vadd.f32 %v460, %v552
      %v554 = vpop.f32.mrb[0].mxu0
      %555 = vmatprep.mubr.bf16.mxu0 0
      %556 = vmatmul.mubr.bf16.gmra.mrb[0].mxu0 %v497
      %v557 = vpop.f32.mrb[0].mxu0
      %v558 = vadd.f32 %v460, %v557
      %v559 = vpop.f32.mrb[0].mxu0
      %v560 = vpop.f32.mrb[0].mxu0
      %v561 = vadd.f32 %v460, %v560
      %v562 = vpop.f32.mrb[0].mxu0
      %563 = vdwg.mxu0
      %v564 = vxor.u32 %v534, 2147483648
      %v565 = vxor.u32 %v537, 2147483648
      %v566 = vxor.u32 %v542, 2147483648
      %v567 = vxor.u32 %v545, 2147483648
      %v568 = vxor.u32 %v550, 2147483648
      %v569 = vxor.u32 %v553, 2147483648
      %v570 = vxor.u32 %v558, 2147483648
      %v571 = vxor.u32 %v561, 2147483648
      %v572 = vmul.f32 %v564, 1.442695
      %v573 = vpow.pop %v572
      %v574 = vmul.f32 %v565, 1.442695
      %v575 = vpow.pop %v574
      %v576 = vmul.f32 %v566, 1.442695
      %v577 = vpow.pop %v576
      %v578 = vmul.f32 %v567, 1.442695
      %v579 = vpow.pop %v578
      %v580 = vmul.f32 %v568, 1.442695
      %v581 = vpow.pop %v580
      %v582 = vmul.f32 %v569, 1.442695
      %v583 = vpow.pop %v582
      %v584 = vmul.f32 %v570, 1.442695
      %v585 = vpow.pop %v584
      %v586 = vmul.f32 %v571, 1.442695
      %v587 = vpow.pop %v586
      %v588 = vadd.f32 %v573, 1.0
      %v589 = vadd.f32 %v575, 1.0
      %v590 = vadd.f32 %v577, 1.0
      %v591 = vadd.f32 %v579, 1.0
      %v592 = vadd.f32 %v581, 1.0
      %v593 = vadd.f32 %v583, 1.0
      %v594 = vadd.f32 %v585, 1.0
      %v595 = vadd.f32 %v587, 1.0
      %v596 = vrcp.pop %v588
      %v597 = vmul.f32 1.0, %v596
      %v598 = vrcp.pop %v589
      %v599 = vmul.f32 1.0, %v598
      %v600 = vrcp.pop %v590
      %v601 = vmul.f32 1.0, %v600
      %v602 = vrcp.pop %v591
      %v603 = vmul.f32 1.0, %v602
      %v604 = vrcp.pop %v592
      %v605 = vmul.f32 1.0, %v604
      %v606 = vrcp.pop %v593
      %v607 = vmul.f32 1.0, %v606
      %v608 = vrcp.pop %v594
      %v609 = vmul.f32 1.0, %v608
      %v610 = vrcp.pop %v595
      %v611 = vmul.f32 1.0, %v610
      %v612 = vmul.f32 %v534, %v597
      %v613 = vmul.f32 %v537, %v599
      %v614 = vmul.f32 %v542, %v601
      %v615 = vmul.f32 %v545, %v603
      %v616 = vmul.f32 %v550, %v605
      %v617 = vmul.f32 %v553, %v607
      %v618 = vmul.f32 %v558, %v609
      %v619 = vmul.f32 %v561, %v611
      %620 = vst.msk [vmem:[#allocation2] sm:$0xff] %vm416, 0.0
      %vm621 = vcmask 123904
      %622 = vst.msk [vmem:[#allocation2 + $0x8] sm:$0x3] %vm621, 0.0
      %623 = vst.msk [vmem:[#allocation2 + $0x10] sm:$0xff] %vm416, 0.0
      %624 = vst.msk [vmem:[#allocation2 + $0x18] sm:$0x3] %vm621, 0.0
      %625 = vst.msk [vmem:[#allocation2 + $0x20] sm:$0xff] %vm416, 0.0
      %626 = vst.msk [vmem:[#allocation2 + $0x28] sm:$0x3] %vm621, 0.0
      %627 = vst.msk [vmem:[#allocation2 + $0x30] sm:$0xff] %vm416, 0.0
      %628 = vst.msk [vmem:[#allocation2 + $0x38] sm:$0x3] %vm621, 0.0
      %629 = vst.msk [vmem:[#allocation2 + $0x40] sm:$0xff] %vm416, 0.0
      %630 = vst.msk [vmem:[#allocation2 + $0x48] sm:$0x3] %vm621, 0.0
      %631 = vst.msk [vmem:[#allocation2 + $0x50] sm:$0xff] %vm416, 0.0
      %632 = vst.msk [vmem:[#allocation2 + $0x58] sm:$0x3] %vm621, 0.0
      %633 = vst.msk [vmem:[#allocation2 + $0x60] sm:$0xff] %vm416, 0.0
      %634 = vst.msk [vmem:[#allocation2 + $0x68] sm:$0x3] %vm621, 0.0
      %635 = vst.msk [vmem:[#allocation2 + $0x70] sm:$0xff] %vm416, 0.0
      %636 = vst.msk [vmem:[#allocation2 + $0x78] sm:$0x3] %vm621, 0.0
      %637 = vst.msk [vmem:[#allocation2 + $0x80] sm:$0xff] %vm416, 0.0
      %638 = vst.msk [vmem:[#allocation2 + $0x88] sm:$0x3] %vm621, 0.0
      %639 = vst.msk [vmem:[#allocation2 + $0x90] sm:$0xff] %vm416, 0.0
      %640 = vst.msk [vmem:[#allocation2 + $0x98] sm:$0x3] %vm621, 0.0
      %s641 = scalar_lea.vmem [#allocation2], 16
      %642 = vst.msk [vmem:[%s641 + $0x1] sm:$0xff] %vm416, %v612
      %643 = vst.msk [vmem:[%s641 + $0x11] sm:$0xff] %vm416, %v613
      %644 = vst.msk [vmem:[%s641 + $0x21] sm:$0xff] %vm416, %v614
      %645 = vst.msk [vmem:[%s641 + $0x31] sm:$0xff] %vm416, %v615
      %646 = vst.msk [vmem:[%s641 + $0x41] sm:$0xff] %vm416, %v616
      %647 = vst.msk [vmem:[%s641 + $0x51] sm:$0xff] %vm416, %v617
      %648 = vst.msk [vmem:[%s641 + $0x61] sm:$0xff] %vm416, %v618
      %649 = vst.msk [vmem:[%s641 + $0x71] sm:$0xff] %vm416, %v619
      %v650 = vld [vmem:[#allocation2] sm:$0xff]
      %v651 = vld [vmem:[#allocation2 + $0x8] sm:$0x3]
      %v652 = vld [vmem:[#allocation2 + $0x10] sm:$0xff]
      %v653 = vld [vmem:[#allocation2 + $0x18] sm:$0x3]
      %v654 = vld [vmem:[#allocation2 + $0x20] sm:$0xff]
      %v655 = vld [vmem:[#allocation2 + $0x28] sm:$0x3]
      %v656 = vld [vmem:[#allocation2 + $0x30] sm:$0xff]
      %v657 = vld [vmem:[#allocation2 + $0x38] sm:$0x3]
      %v658 = vld [vmem:[#allocation2 + $0x40] sm:$0xff]
      %v659 = vld [vmem:[#allocation2 + $0x48] sm:$0x3]
      %v660 = vld [vmem:[#allocation2 + $0x50] sm:$0xff]
      %v661 = vld [vmem:[#allocation2 + $0x58] sm:$0x3]
      %v662 = vld [vmem:[#allocation2 + $0x60] sm:$0xff]
      %v663 = vld [vmem:[#allocation2 + $0x68] sm:$0x3]
      %v664 = vld [vmem:[#allocation2 + $0x70] sm:$0xff]
      %v665 = vld [vmem:[#allocation2 + $0x78] sm:$0x3]
      %v666 = vld [vmem:[#allocation2 + $0x80] sm:$0xff]
      %v667 = vld [vmem:[#allocation2 + $0x88] sm:$0x3]
      %v676 = vrot.slane %v650, 1
      %v677 = vrot.slane %v651, 1
      %v678 = vsel %vm314, %v676, %v677
      %v679 = vrot.slane %v654, 1
      %v680 = vrot.slane %v655, 1
      %v681 = vsel %vm314, %v679, %v680
      %v682 = vrot.slane %v658, 1
      %v683 = vrot.slane %v659, 1
      %v684 = vsel %vm314, %v682, %v683
      %v685 = vrot.slane %v662, 1
      %v686 = vrot.slane %v663, 1
      %v687 = vsel %vm314, %v685, %v686
      %688 = vrot.lane.b32.xlu0 %v678, 16
      %v689 = vpop.permute.xlu0 %688
      %690 = vrot.lane.b32.xlu0 %v681, 16
      %v691 = vpop.permute.xlu0 %690
      %692 = vrot.lane.b32.xlu0 %v684, 16
      %v693 = vpop.permute.xlu0 %692
      %694 = vrot.lane.b32.xlu0 %v687, 16
      %v695 = vpop.permute.xlu0 %694
      %vm700 = vcmask 1045504
      %v701 = vrot.slane %v650, 2
      %v702 = vrot.slane %v651, 2
      %v703 = vsel %vm700, %v701, %v702
      %v704 = vrot.slane %v654, 2
      %v705 = vrot.slane %v655, 2
      %v706 = vsel %vm700, %v704, %v705
      %v707 = vrot.slane %v658, 2
      %v708 = vrot.slane %v659, 2
      %v709 = vsel %vm700, %v707, %v708
      %v710 = vrot.slane %v662, 2
      %v711 = vrot.slane %v663, 2
      %v712 = vsel %vm700, %v710, %v711
      %713 = vrot.lane.b32.xlu0 %v703, 32
      %v714 = vpop.permute.xlu0 %713
      %715 = vrot.lane.b32.xlu0 %v706, 32
      %v716 = vpop.permute.xlu0 %715
      %717 = vrot.lane.b32.xlu0 %v709, 32
      %v718 = vpop.permute.xlu0 %717
      %719 = vrot.lane.b32.xlu0 %v712, 32
      %v720 = vpop.permute.xlu0 %719
      %729 = vrot.lane.b32.xlu0 %v652, 48
      %v730 = vpop.permute.xlu0 %729
      %731 = vrot.lane.b32.xlu0 %v656, 48
      %v732 = vpop.permute.xlu0 %731
      %733 = vrot.lane.b32.xlu0 %v660, 48
      %v734 = vpop.permute.xlu0 %733
      %735 = vrot.lane.b32.xlu0 %v664, 48
      %v736 = vpop.permute.xlu0 %735
      %v745 = vrot.slane %v652, 1
      %v746 = vrot.slane %v653, 1
      %v747 = vsel %vm314, %v745, %v746
      %v748 = vrot.slane %v656, 1
      %v749 = vrot.slane %v657, 1
      %v750 = vsel %vm314, %v748, %v749
      %v751 = vrot.slane %v660, 1
      %v752 = vrot.slane %v661, 1
      %v753 = vsel %vm314, %v751, %v752
      %v754 = vrot.slane %v664, 1
      %v755 = vrot.slane %v665, 1
      %v756 = vsel %vm314, %v754, %v755
      %757 = vrot.lane.b32.xlu0 %v747, 64
      %v758 = vpop.permute.xlu0 %757
      %759 = vrot.lane.b32.xlu0 %v750, 64
      %v760 = vpop.permute.xlu0 %759
      %761 = vrot.lane.b32.xlu0 %v753, 64
      %v762 = vpop.permute.xlu0 %761
      %763 = vrot.lane.b32.xlu0 %v756, 64
      %v764 = vpop.permute.xlu0 %763
      %v769 = vrot.slane %v652, 2
      %v770 = vrot.slane %v653, 2
      %v771 = vsel %vm700, %v769, %v770
      %v772 = vrot.slane %v656, 2
      %v773 = vrot.slane %v657, 2
      %v774 = vsel %vm700, %v772, %v773
      %v775 = vrot.slane %v660, 2
      %v776 = vrot.slane %v661, 2
      %v777 = vsel %vm700, %v775, %v776
      %v778 = vrot.slane %v664, 2
      %v779 = vrot.slane %v665, 2
      %v780 = vsel %vm700, %v778, %v779
      %781 = vrot.lane.b32.xlu0 %v771, 80
      %v782 = vpop.permute.xlu0 %781
      %783 = vrot.lane.b32.xlu0 %v774, 80
      %v784 = vpop.permute.xlu0 %783
      %785 = vrot.lane.b32.xlu0 %v777, 80
      %v786 = vpop.permute.xlu0 %785
      %787 = vrot.lane.b32.xlu0 %v780, 80
      %v788 = vpop.permute.xlu0 %787
      %794 = vrot.lane.b32.xlu0 %v654, 96
      %v795 = vpop.permute.xlu0 %794
      %796 = vrot.lane.b32.xlu0 %v658, 96
      %v797 = vpop.permute.xlu0 %796
      %798 = vrot.lane.b32.xlu0 %v662, 96
      %v799 = vpop.permute.xlu0 %798
      %800 = vrot.lane.b32.xlu0 %v666, 96
      %v801 = vpop.permute.xlu0 %800
      %v807 = vrot.slane %v666, 1
      %v808 = vrot.slane %v667, 1
      %v809 = vsel %vm314, %v807, %v808
      %810 = vrot.lane.b32.xlu0 %v681, 112
      %v811 = vpop.permute.xlu0 %810
      %812 = vrot.lane.b32.xlu0 %v684, 112
      %v813 = vpop.permute.xlu0 %812
      %814 = vrot.lane.b32.xlu0 %v687, 112
      %v815 = vpop.permute.xlu0 %814
      %816 = vrot.lane.b32.xlu0 %v809, 112
      %v817 = vpop.permute.xlu0 %816
      %v822 = vrot.slane %v666, 2
      %v823 = vrot.slane %v667, 2
      %v824 = vsel %vm700, %v822, %v823
      %v829 = vsel %vm416, %v650, %v689
      %v830 = vsel %vm416, %v654, %v691
      %v831 = vsel %vm416, %v658, %v693
      %v832 = vsel %vm416, %v662, %v695
      %v833 = vsel %vm425, %v829, %v714
      %v834 = vsel %vm425, %v830, %v716
      %v835 = vsel %vm425, %v831, %v718
      %v836 = vsel %vm425, %v832, %v720
      %v837 = vsel %vm434, %v833, %v730
      %v838 = vsel %vm434, %v834, %v732
      %v839 = vsel %vm434, %v835, %v734
      %v840 = vsel %vm434, %v836, %v736
      %v841 = vsel %vm486, %v837, %v758
      %v842 = vsel %vm486, %v838, %v760
      %v843 = vsel %vm486, %v839, %v762
      %v844 = vsel %vm486, %v840, %v764
      %vm845 = vcmask 654336
      %v846 = vsel %vm845, %v841, %v782
      %v847 = vsel %vm845, %v842, %v784
      %v848 = vsel %vm845, %v843, %v786
      %v849 = vsel %vm845, %v844, %v788
      %vm850 = vcmask 785408
      %v851 = vsel %vm850, %v846, %v795
      %v852 = vsel %vm850, %v847, %v797
      %v853 = vsel %vm850, %v848, %v799
      %v854 = vsel %vm850, %v849, %v801
      %vm855 = vcmask 916480
      %v856 = vsel %vm855, %v851, %v811
      %v857 = vsel %vm855, %v852, %v813
      %v858 = vsel %vm855, %v853, %v815
      %v859 = vsel %vm855, %v854, %v817
      %v860 = vpack.c.bf16 %v857, %v856
      %v861 = vpack.c.bf16 %v709, %v706
      %v862 = vpack.c.bf16 %v859, %v858
      %v863 = vpack.c.bf16 %v824, %v712
      %v864 = vld [vmem:[%s3] sm:$0xf]
      %v865 = vld [vmem:[%s3 + $0x4] sm:$0xf]
      %v866 = vld [vmem:[%s3 + $0x8] sm:$0xf]
      %v867 = vld [vmem:[%s3 + $0xc] sm:$0xf]
      %v868 = vld [vmem:[%s3 + $0x10] sm:$0xf]
      %v869 = vld [vmem:[%s3 + $0x14] sm:$0xf]
      %v870 = vld [vmem:[%s3 + $0x18] sm:$0xf]
      %v871 = vld [vmem:[%s3 + $0x1c] sm:$0xf]
      %v872 = vld [vmem:[%s3 + $0x20] sm:$0xf]
      %v873 = vld [vmem:[%s3 + $0x24] sm:$0xf]
      %v874 = vld [vmem:[%s3 + $0x28] sm:$0xf]
      %v875 = vld [vmem:[%s3 + $0x2c] sm:$0xf]
      %v876 = vld [vmem:[%s3 + $0x30] sm:$0xf]
      %v877 = vld [vmem:[%s3 + $0x34] sm:$0xf]
      %v878 = vld [vmem:[%s3 + $0x38] sm:$0xf]
      %v879 = vld [vmem:[%s3 + $0x3c] sm:$0xf]
      %v880 = vld [vmem:[%s3 + $0x40] sm:$0xf]
      %v881 = vld [vmem:[%s3 + $0x44] sm:$0xf]
      %v882 = vld [vmem:[%s4] sm:$0x1]
      %v884 = vlaneseq
      %v885 = vshrl.u32 %v884, 7
      %v886 = vsub.s32 0, %v885
      %v887 = vrot.slane %v882, %v886
      %v907 = vunpack.c.l.b16 %v864
      %v908 = vunpack.c.l.b16 %v865
      %v909 = vunpack.c.l.b16 %v866
      %v910 = vunpack.c.l.b16 %v867
      %v911 = vunpack.c.l.b16 %v868
      %v912 = vunpack.c.l.b16 %v869
      %v913 = vunpack.c.l.b16 %v870
      %v914 = vunpack.c.l.b16 %v871
      %v915 = vunpack.c.l.b16 %v872
      %v916 = vunpack.c.l.b16 %v873
      %v917 = vunpack.c.l.b16 %v874
      %v918 = vunpack.c.l.b16 %v875
      %v919 = vunpack.c.l.b16 %v876
      %v920 = vunpack.c.l.b16 %v877
      %v921 = vunpack.c.l.b16 %v878
      %v922 = vunpack.c.l.b16 %v879
      %v923 = vunpack.c.l.b16 %v880
      %v924 = vunpack.c.l.b16 %v881
      %v925 = vpack.c.b16 %v908, %v907
      %v926 = vpack.c.b16 %v910, %v909
      %v927 = vpack.c.b16 %v912, %v911
      %v928 = vpack.c.b16 %v914, %v913
      %v929 = vpack.c.b16 %v916, %v915
      %v930 = vpack.c.b16 %v918, %v917
      %v931 = vpack.c.b16 %v920, %v919
      %v932 = vpack.c.b16 %v922, %v921
      %v933 = vpack.c.b16 %v924, %v923
      %v944 = vsel %vm416, %v861, 0
      %v947 = vsel %vm416, %v863, 0
      %949 = vmatprep.subr.bf16.mxu0 0
      %950 = vmatpush1.bf16.msra.mxu0 %v925
      %951 = vmatprep.subr.bf16.mxu0 0
      %952 = vmatpush1.bf16.msra.mxu0 %v926
      %953 = vmatprep.subr.bf16.mxu0 0
      %954 = vmatpush1.bf16.msra.mxu0 %v927
      %955 = vmatprep.subr.bf16.mxu0 0
      %956 = vmatpush1.bf16.msra.mxu0 %v928
      %957 = vmatprep.subr.bf16.mxu0 0
      %958 = vmatpush1.bf16.msra.mxu0 %v929
      %959 = vmatprep.subr.bf16.mxu0 0
      %960 = vmatpush1.bf16.msra.mxu0 %v930
      %961 = vmatprep.subr.bf16.mxu0 0
      %962 = vmatpush1.bf16.msra.mxu0 %v931
      %963 = vmatprep.subr.bf16.mxu0 0
      %964 = vmatpush1.bf16.msra.mxu0 %v932
      %965 = vmatprep.subr.bf16.mxu0 0
      %966 = vmatpush1.bf16.msra.mxu0 %v933
      %967 = vmatprep.subr.bf16.mxu0 0
      %968 = vmatpush1.bf16.msra.mxu0 0
      %969 = vmatprep.subr.bf16.mxu0 0
      %970 = vmatpush1.bf16.msra.mxu0 0
      %971 = vmatprep.subr.bf16.mxu0 0
      %972 = vmatpush1.bf16.msra.mxu0 0
      %973 = vmatprep.subr.bf16.mxu0 0
      %974 = vmatpush1.bf16.msra.mxu0 0
      %975 = vmatprep.subr.bf16.mxu0 0
      %976 = vmatpush1.bf16.msra.mxu0 0
      %977 = vmatprep.subr.bf16.mxu0 0
      %978 = vmatpush1.bf16.msra.mxu0 0
      %979 = vmatprep.subr.bf16.mxu0 0
      %980 = vmatpush1.bf16.msra.mxu0 0
      %981 = vmatprep.mubr.bf16.mxu0 %v944
      %982 = vmatmul.mubr.bf16.gmra.mrb[0].mxu0 %v860
      %v983 = vpop.f32.mrb[0].mxu0
      %v984 = vadd.f32 %v887, %v983
      %v985 = vpop.f32.mrb[0].mxu0
      %v986 = vpop.f32.mrb[0].mxu0
      %v987 = vadd.f32 %v887, %v986
      %v988 = vpop.f32.mrb[0].mxu0
      %989 = vmatprep.mubr.bf16.mxu0 %v947
      %990 = vmatmul.mubr.bf16.gmra.mrb[0].mxu0 %v862
      %v991 = vpop.f32.mrb[0].mxu0
      %v992 = vadd.f32 %v887, %v991
      %v993 = vpop.f32.mrb[0].mxu0
      %v994 = vpop.f32.mrb[0].mxu0
      %v995 = vadd.f32 %v887, %v994
      %v996 = vpop.f32.mrb[0].mxu0
      %997 = vdwg.mxu0
      %v998 = vxor.u32 %v984, 2147483648
      %v999 = vxor.u32 %v987, 2147483648
      %v1000 = vxor.u32 %v992, 2147483648
      %v1001 = vxor.u32 %v995, 2147483648
      %v1002 = vmul.f32 %v998, 1.442695
      %v1003 = vpow.pop %v1002
      %v1004 = vmul.f32 %v999, 1.442695
      %v1005 = vpow.pop %v1004
      %v1006 = vmul.f32 %v1000, 1.442695
      %v1007 = vpow.pop %v1006
      %v1008 = vmul.f32 %v1001, 1.442695
      %v1009 = vpow.pop %v1008
      %v1010 = vadd.f32 %v1003, 1.0
      %v1011 = vadd.f32 %v1005, 1.0
      %v1012 = vadd.f32 %v1007, 1.0
      %v1013 = vadd.f32 %v1009, 1.0
      %v1014 = vrcp.pop %v1010
      %v1015 = vmul.f32 1.0, %v1014
      %v1016 = vrcp.pop %v1011
      %v1017 = vmul.f32 1.0, %v1016
      %v1018 = vrcp.pop %v1012
      %v1019 = vmul.f32 1.0, %v1018
      %v1020 = vrcp.pop %v1013
      %v1021 = vmul.f32 1.0, %v1020
      %v1022 = vmul.f32 %v984, %v1015
      %v1023 = vmul.f32 %v987, %v1017
      %v1024 = vmul.f32 %v992, %v1019
      %v1025 = vmul.f32 %v995, %v1021
      %v1026 = vpack.c.bf16 %v1023, %v1022
      %v1027 = vpack.c.bf16 %v1025, %v1024
      %v1028 = vld [vmem:[%s5] sm:$0xf]
      %v1029 = vld [vmem:[%s5 + $0x4] sm:$0xf]
      %v1030 = vld [vmem:[%s5 + $0x8] sm:$0xf]
      %v1031 = vld [vmem:[%s5 + $0xc] sm:$0xf]
      %v1032 = vld [vmem:[%s6] sm:$0x1]
      %v1034 = vlaneseq
      %v1035 = vshrl.u32 %v1034, 7
      %v1036 = vsub.s32 0, %v1035
      %v1037 = vrot.slane %v1032, %v1036
      %v1043 = vunpack.c.l.b16 %v1028
      %v1044 = vunpack.c.l.b16 %v1029
      %v1045 = vunpack.c.l.b16 %v1030
      %v1046 = vunpack.c.l.b16 %v1031
      %v1047 = vpack.c.b16 %v1044, %v1043
      %v1048 = vpack.c.b16 %v1046, %v1045
      %v1052 = vsel %vm425, %v1026, 0
      %v1055 = vsel %vm425, %v1027, 0
      %1057 = vmatprep.subr.bf16.mxu0 0
      %1058 = vmatpush1.bf16.msra.mxu0 %v1047
      %1059 = vmatprep.subr.bf16.mxu0 0
      %1060 = vmatpush1.bf16.msra.mxu0 %v1048
      %1061 = vmatprep.subr.bf16.mxu0 0
      %1062 = vmatpush1.bf16.msra.mxu0 0
      %1063 = vmatprep.subr.bf16.mxu0 0
      %1064 = vmatpush1.bf16.msra.mxu0 0
      %1065 = vmatprep.subr.bf16.mxu0 0
      %1066 = vmatpush1.bf16.msra.mxu0 0
      %1067 = vmatprep.subr.bf16.mxu0 0
      %1068 = vmatpush1.bf16.msra.mxu0 0
      %1069 = vmatprep.subr.bf16.mxu0 0
      %1070 = vmatpush1.bf16.msra.mxu0 0
      %1071 = vmatprep.subr.bf16.mxu0 0
      %1072 = vmatpush1.bf16.msra.mxu0 0
      %1073 = vmatprep.subr.bf16.mxu0 0
      %1074 = vmatpush1.bf16.msra.mxu0 0
      %1075 = vmatprep.subr.bf16.mxu0 0
      %1076 = vmatpush1.bf16.msra.mxu0 0
      %1077 = vmatprep.subr.bf16.mxu0 0
      %1078 = vmatpush1.bf16.msra.mxu0 0
      %1079 = vmatprep.subr.bf16.mxu0 0
      %1080 = vmatpush1.bf16.msra.mxu0 0
      %1081 = vmatprep.subr.bf16.mxu0 0
      %1082 = vmatpush1.bf16.msra.mxu0 0
      %1083 = vmatprep.subr.bf16.mxu0 0
      %1084 = vmatpush1.bf16.msra.mxu0 0
      %1085 = vmatprep.subr.bf16.mxu0 0
      %1086 = vmatpush1.bf16.msra.mxu0 0
      %1087 = vmatprep.subr.bf16.mxu0 0
      %1088 = vmatpush1.bf16.msra.mxu0 0
      %1089 = vmatprep.mubr.bf16.mxu0 0
      %1090 = vmatmul.mubr.bf16.gmra.mrb[0].mxu0 %v1052
      %v1091 = vpop.f32.mrb[0].mxu0
      %v1092 = vadd.f32 %v1037, %v1091
      %v1093 = vpop.f32.mrb[0].mxu0
      %v1094 = vpop.f32.mrb[0].mxu0
      %v1095 = vadd.f32 %v1037, %v1094
      %v1096 = vpop.f32.mrb[0].mxu0
      %1097 = vmatprep.mubr.bf16.mxu0 0
      %1098 = vmatmul.mubr.bf16.gmra.mrb[0].mxu0 %v1055
      %v1099 = vpop.f32.mrb[0].mxu0
      %v1100 = vadd.f32 %v1037, %v1099
      %v1101 = vpop.f32.mrb[0].mxu0
      %v1102 = vpop.f32.mrb[0].mxu0
      %v1103 = vadd.f32 %v1037, %v1102
      %v1104 = vpop.f32.mrb[0].mxu0
      %1105 = vdwg.mxu0
      %1106 = vst [vmem:[%s278] sm:$0xff] %v1092
      %1107 = vst [vmem:[%s278 + $0x8] sm:$0xff] %v1095
      %1108 = vst [vmem:[%s278 + $0x10] sm:$0xff] %v1100
      %1109 = vst [vmem:[%s278 + $0x18] sm:$0xff] %v1103
      %p1110 = scmp.lt.s32.totalorder %s18, 1
      %s1111 = scalar_select %p1110, %s18, 1
      %s1112 = smul.addr %s1111, 4
      %s1113 = smul.addr %s1112, 8
      %s1114 = scalar_lea.vmem %s7, %s1113
      // Predicated region
      $region49: #{trans_weather_yolov6.3} parent=47 // pred_check
        %p1115 = pneg %p188
      $region50: #{trans_weather_yolov6.3} parent=47 // pred_check_branch
        %1117 = sbr.rel (%p1115) target = $region52
      $region51: #{trans_weather_yolov6.3} parent=47 // pred_region
        _
      $region52: #{trans_weather_yolov6.3} parent=47 // pred_fallthru
        _
    $region48: #{trans_weather_yolov6.3} parent=5 // pred_fallthru
      _
    %p1118 = scmp.le.s32.totalorder 2, %s13
    // Predicated region
    $region53: #{trans_weather_yolov6.3} parent=5 // pred_check
      %p1119 = pneg %p1118
    $region54: #{trans_weather_yolov6.3} parent=5 // pred_check_branch
      %1121 = sbr.rel (%p1119) target = $region56
    $region55: #{trans_weather_yolov6.3} parent=5 // pred_region
      %s1122 = ssub.s32 %s13, 2
      // Predicated region
      $region57: #{trans_weather_yolov6.3} parent=55 // pred_check
        %p1123 = pneg %p194
      $region58: #{trans_weather_yolov6.3} parent=55 // pred_check_branch
        %1125 = sbr.rel (%p1123) target = $region60
      $region59: #{trans_weather_yolov6.3} parent=55 // pred_region
        %p1126 = scmp.lt.s32.totalorder %s19, 1
        %s1127 = scalar_select %p1126, %s19, 1
        %s1128 = smul.addr %s1127, 4
        %s1129 = smul.addr %s1128, 8
        %s1130 = scalar_lea.vmem %s7, %s1129
      $region60: #{trans_weather_yolov6.3} parent=55 // pred_fallthru
        _
    $region56: #{trans_weather_yolov6.3} parent=5 // pred_fallthru
      _
  $region6: #{trans_weather_yolov6.3} parent=0 // loop_footer
    %s17 = sadd.s32 1, %s13
  $region7: #{trans_weather_yolov6.3} parent=0 // loop_footer_branch
    %12 = sbr.rel target = $region3
  $region8: #{trans_weather_yolov6.3} parent=0 // loop_exit
    _

</llo_original>
